<compile_context>
chip_gen: v7x
topology: tpu7x:2x2x1
jax: 0.10.0
libtpu: 0.0.40
codegen_flags: <defaults>
</compile_context>

<pallas_src>
import functools

import jax
import jax.numpy as jnp
from jax import lax
from jax.experimental import pallas as pl
from jax.experimental.pallas import tpu as pltpu

BN_EPS = 1e-5


def _conv_tile(xp_ref, wc_ref, *, TH, W_out, K, Cin, Cpad):
    """Fused depthwise+pointwise conv for one (batch, row-tile) grid cell.

    xp_ref : (1, Hp, Wp, Cin)   full zero-padded image for this batch element
    wc_ref : (K*K, Cin, Cpad)   per-tap combined (depthwise*pointwise) weights
    returns: (TH*W_out, Cpad)   fp32 pre-BN activations for this row tile
    """
    t = pl.program_id(1)
    h0 = pl.multiple_of(t * TH, TH)
    xt = xp_ref[0, pl.ds(h0, TH + K - 1), :, :].astype(jnp.float32)  # (TH+K-1, Wp, Cin)
    wc = wc_ref[...].astype(jnp.float32)                              # (K*K, Cin, Cpad)

    acc = None
    for ky in range(K):
        for kx in range(K):
            patch = xt[ky:ky + TH, kx:kx + W_out, :].reshape(TH * W_out, Cin)
            contrib = jnp.dot(patch, wc[ky * K + kx],
                              preferred_element_type=jnp.float32)
            acc = contrib if acc is None else acc + contrib           # MXU accumulate
    return acc


def _stats_kernel(xp_ref, wc_ref, stats_ref, *, TH, W_out, K, Cin, Cpad):
    """Pass 1: per-tile partial (sum, sum-of-squares) over rows, per channel."""
    z = _conv_tile(xp_ref, wc_ref, TH=TH, W_out=W_out, K=K, Cin=Cin, Cpad=Cpad)
    s1 = jnp.sum(z, axis=0, keepdims=True)          # (1, Cpad)
    s2 = jnp.sum(z * z, axis=0, keepdims=True)      # (1, Cpad)
    stats_ref[...] = jnp.concatenate([s1, s2], axis=0).reshape(1, 1, 2, Cpad)


def _apply_kernel(xp_ref, wc_ref, scale_ref, shift_ref, o_ref,
                  *, TH, W_out, K, Cin, Cpad):
    """Pass 2: recompute conv tile, apply BN affine (scale/shift) + ReLU."""
    z = _conv_tile(xp_ref, wc_ref, TH=TH, W_out=W_out, K=K, Cin=Cin, Cpad=Cpad)
    out = jnp.maximum(z * scale_ref[...] + shift_ref[...], 0.0)
    o_ref[...] = out.reshape(1, TH, W_out, Cpad).astype(o_ref.dtype)


def depthwise_separable_conv(x_nchw, params, *, depth_kernel_size=3, depth_padding=1):
    """x_nchw: (N, Cin, H, W) float32.  Returns (N, Cout, H, W) float32."""
    dw_w, dw_b, pw_w, pw_b, gamma, beta = params
    del dw_b, pw_b  # per-channel constants cancel exactly under training-mode BN
    K = depth_kernel_size
    pad = depth_padding
    N, Cin, H, W = x_nchw.shape
    Cout = pw_w.shape[1]
    Cpad = ((Cout + 127) // 128) * 128              # lane-dense channel padding

    # NCHW -> NHWC + spatial zero-pad: single fused XLA producer (glue).
    # TODO(synk): eliminate the padded HBM copy via in-kernel border masking /
    # halo DMA for large spatial dims (also enables row-halo tiling of xp).
    x = jnp.transpose(x_nchw, (0, 2, 3, 1))
    xp = jnp.pad(x, ((0, 0), (pad, pad), (pad, pad), (0, 0)))
    Hp, Wp = H + 2 * pad, W + 2 * pad
    H_out, W_out = Hp - K + 1, Wp - K + 1

    # Row-tile height: keep several tiles per image so the grid pipelines.
    TH = 8 if H_out % 8 == 0 else H_out
    n_t = H_out // TH
    grid = (N, n_t)

    # Combined per-tap weights: Wc[tap, ci, co] = dw[tap, ci] * pw[ci, co],
    # zero-padded on the Cout axis (padded channels stay exactly zero).
    pw_pad = jnp.zeros((Cin, Cpad), jnp.float32).at[:, :Cout].set(pw_w)
    wc = (dw_w.reshape(K * K, Cin, 1).astype(jnp.float32) * pw_pad[None, :, :])

    xp_spec = pl.BlockSpec((1, Hp, Wp, Cin), lambda n, t: (n, 0, 0, 0))
    wc_spec = pl.BlockSpec((K * K, Cin, Cpad), lambda n, t: (0, 0, 0))
    vec_spec = pl.BlockSpec((1, Cpad), lambda n, t: (0, 0))
    stats_spec = pl.BlockSpec((1, 1, 2, Cpad), lambda n, t: (n, t, 0, 0))
    y_spec = pl.BlockSpec((1, TH, W_out, Cpad), lambda n, t: (n, t, 0, 0))

    cparams = pltpu.CompilerParams(
        dimension_semantics=("parallel", "parallel"),
        vmem_limit_bytes=32 * 1024 * 1024)

    # ---- pass 1: per-tile partial sums / sums-of-squares (no big writeback) --
    stats = pl.pallas_call(
        functools.partial(_stats_kernel, TH=TH, W_out=W_out, K=K, Cin=Cin, Cpad=Cpad),
        out_shape=jax.ShapeDtypeStruct((N, n_t, 2, Cpad), jnp.float32),
        grid=grid,
        in_specs=[xp_spec, wc_spec],
        out_specs=stats_spec,
        compiler_params=cparams,
    )(xp, wc)

    # ---- tiny global reduction + BN coefficient folding (plain JAX) ---------
    count = float(N * H_out * W_out)
    sums = jnp.sum(stats, axis=(0, 1))                       # (2, Cpad)
    mean = sums[0] / count
    var = jnp.maximum(sums[1] / count - mean * mean, 0.0)
    gamma_pad = jnp.zeros((Cpad,), jnp.float32).at[:Cout].set(gamma)
    beta_pad = jnp.zeros((Cpad,), jnp.float32).at[:Cout].set(beta)
    scale = (gamma_pad * lax.rsqrt(var + BN_EPS)).reshape(1, Cpad)
    shift = (beta_pad - mean * scale[0]).reshape(1, Cpad)

    # ---- pass 2: recompute conv, apply BN + ReLU, lane-dense store ----------
    y = pl.pallas_call(
        functools.partial(_apply_kernel, TH=TH, W_out=W_out, K=K, Cin=Cin, Cpad=Cpad),
        out_shape=jax.ShapeDtypeStruct((N, H_out, W_out, Cpad), jnp.float32),
        grid=grid,
        in_specs=[xp_spec, wc_spec, vec_spec, vec_spec],
        out_specs=y_spec,
        compiler_params=cparams,
    )(xp, wc, scale, shift)

    # Slice off padded channels and return to the PyTorch NCHW convention.
    return jnp.transpose(y[..., :Cout], (0, 3, 1, 2))


def init_params(key, nin, nout, k=3):
    k1, k2, k3, k4 = jax.random.split(key, 4)
    dw_w = 0.3 * jax.random.normal(k1, (k, k, nin), jnp.float32)      # depthwise weight
    dw_b = 0.1 * jax.random.normal(k2, (nin,), jnp.float32)
    pw_w = 0.3 * jax.random.normal(k3, (nin, nout), jnp.float32)      # pointwise weight
    pw_b = 0.1 * jax.random.normal(k4, (nout,), jnp.float32)
    gamma = jnp.ones((nout,), jnp.float32)                            # BN weight
    beta = jnp.zeros((nout,), jnp.float32)                            # BN bias
    return dw_w, dw_b, pw_w, pw_b, gamma, beta


def _reference(x_nchw, params, padding=1):
    """Pure-JAX reference (matches PyTorch training-mode forward semantics)."""
    dw_w, dw_b, pw_w, pw_b, gamma, beta = params
    N, Cin, H, W = x_nchw.shape
    K = dw_w.shape[0]
    Cout = pw_w.shape[1]
    dw_hwio = dw_w.reshape(K, K, 1, Cin)
    y = lax.conv_general_dilated(
        x_nchw, dw_hwio, window_strides=(1, 1),
        padding=[(padding, padding), (padding, padding)],
        dimension_numbers=("NCHW", "HWIO", "NCHW"),
        feature_group_count=Cin) + dw_b[None, :, None, None]
    pw_hwio = pw_w.reshape(1, 1, Cin, Cout)
    z = lax.conv_general_dilated(
        y, pw_hwio, window_strides=(1, 1), padding=[(0, 0), (0, 0)],
        dimension_numbers=("NCHW", "HWIO", "NCHW")) + pw_b[None, :, None, None]
    mean = jnp.mean(z, axis=(0, 2, 3), keepdims=True)
    var = jnp.mean((z - mean) ** 2, axis=(0, 2, 3), keepdims=True)
    zn = (z - mean) * lax.rsqrt(var + BN_EPS)
    out = zn * gamma[None, :, None, None] + beta[None, :, None, None]
    return jnp.maximum(out, 0.0)


if __name__ == "__main__":
    key = jax.random.PRNGKey(0)
    kx, kp = jax.random.split(key)

    N, Cin, Cout, H, W = 2, 4, 8, 16, 16
    x = jax.random.normal(kx, (N, Cin, H, W), jnp.float32)
    params = init_params(kp, Cin, Cout)

    out = depthwise_separable_conv(x, params)
    out = jax.block_until_ready(out)

    ref = jax.block_until_ready(_reference(x, params))
    assert out.shape == (N, Cout, H, W)
    assert jnp.allclose(out, ref, rtol=1e-3, atol=1e-3), "mismatch vs reference"

    print("KERNEL_OK")
</pallas_src>

<mosaic_0001>
module attributes {stable_mosaic.version = 11 : i64} {
  func.func @_stats_kernel(%arg0: i32, %arg1: i32, %arg2: memref<1x18x18x4xf32, #tpu.memory_space<vmem>>, %arg3: memref<9x4x128xf32, #tpu.memory_space<vmem>>, %arg4: memref<1x1x2x128xf32, #tpu.memory_space<vmem>>) attributes {dimension_semantics = [#tpu.dimension_semantics<parallel>, #tpu.dimension_semantics<parallel>], iteration_bounds = array<i64: 2, 2>, scalar_prefetch = 0 : i64, scratch_operands = 0 : i64, tpu.core_type = #tpu.core_type<tc>, window_params = [{transform_indices = @transform_0, window_bounds = array<i64: 1, 18, 18, 4>}, {pipeline_mode = #tpu.pipeline_mode<synchronous>, transform_indices = @transform_1, window_bounds = array<i64: 9, 4, 128>}, {transform_indices = @transform_2, window_bounds = array<i64: 1, 1, 2, 128>}]} {
    %c8_i32 = arith.constant 8 : i32
    %0 = arith.muli %arg1, %c8_i32 : i32
    %1 = tpu.assume_multiple %0, 8 : i32
    %c0 = arith.constant 0 : index
    %2 = arith.index_cast %1 : i32 to index
    %c0_0 = arith.constant 0 : index
    %c0_1 = arith.constant 0 : index
    %3 = vector.load %arg2[%c0, %2, %c0_0, %c0_1] : memref<1x18x18x4xf32, #tpu.memory_space<vmem>>, vector<1x10x18x4xf32>
    %4 = vector.shape_cast %3 : vector<1x10x18x4xf32> to vector<10x18x4xf32>
    %c0_2 = arith.constant 0 : index
    %c0_3 = arith.constant 0 : index
    %c0_4 = arith.constant 0 : index
    %5 = vector.load %arg3[%c0_2, %c0_3, %c0_4] : memref<9x4x128xf32, #tpu.memory_space<vmem>>, vector<9x4x128xf32>
    %6 = vector.extract_strided_slice %4 {offsets = [0, 0, 0], sizes = [8, 16, 4], strides = [1, 1, 1]} : vector<10x18x4xf32> to vector<8x16x4xf32>
    %7 = vector.shape_cast %6 : vector<8x16x4xf32> to vector<128x4xf32>
    %8 = vector.extract_strided_slice %5 {offsets = [0, 0, 0], sizes = [1, 4, 128], strides = [1, 1, 1]} : vector<9x4x128xf32> to vector<1x4x128xf32>
    %9 = vector.shape_cast %8 : vector<1x4x128xf32> to vector<4x128xf32>
    %cst = arith.constant dense<0.000000e+00> : vector<128x128xf32>
    %10 = tpu.matmul %7, %9, %cst {dimension_numbers = #tpu.dot_dimension_numbers<[1], [0], [0], [1], [0, 0, 1, 1], [], []>} : vector<128x4xf32>, vector<4x128xf32>, vector<128x128xf32> -> vector<128x128xf32>
    %11 = vector.extract_strided_slice %4 {offsets = [0, 1, 0], sizes = [8, 16, 4], strides = [1, 1, 1]} : vector<10x18x4xf32> to vector<8x16x4xf32>
    %12 = vector.shape_cast %11 : vector<8x16x4xf32> to vector<128x4xf32>
    %13 = vector.extract_strided_slice %5 {offsets = [1, 0, 0], sizes = [1, 4, 128], strides = [1, 1, 1]} : vector<9x4x128xf32> to vector<1x4x128xf32>
    %14 = vector.shape_cast %13 : vector<1x4x128xf32> to vector<4x128xf32>
    %cst_5 = arith.constant dense<0.000000e+00> : vector<128x128xf32>
    %15 = tpu.matmul %12, %14, %cst_5 {dimension_numbers = #tpu.dot_dimension_numbers<[1], [0], [0], [1], [0, 0, 1, 1], [], []>} : vector<128x4xf32>, vector<4x128xf32>, vector<128x128xf32> -> vector<128x128xf32>
    %16 = arith.addf %10, %15 : vector<128x128xf32>
    %17 = vector.extract_strided_slice %4 {offsets = [0, 2, 0], sizes = [8, 16, 4], strides = [1, 1, 1]} : vector<10x18x4xf32> to vector<8x16x4xf32>
    %18 = vector.shape_cast %17 : vector<8x16x4xf32> to vector<128x4xf32>
    %19 = vector.extract_strided_slice %5 {offsets = [2, 0, 0], sizes = [1, 4, 128], strides = [1, 1, 1]} : vector<9x4x128xf32> to vector<1x4x128xf32>
    %20 = vector.shape_cast %19 : vector<1x4x128xf32> to vector<4x128xf32>
    %cst_6 = arith.constant dense<0.000000e+00> : vector<128x128xf32>
    %21 = tpu.matmul %18, %20, %cst_6 {dimension_numbers = #tpu.dot_dimension_numbers<[1], [0], [0], [1], [0, 0, 1, 1], [], []>} : vector<128x4xf32>, vector<4x128xf32>, vector<128x128xf32> -> vector<128x128xf32>
    %22 = arith.addf %16, %21 : vector<128x128xf32>
    %23 = vector.extract_strided_slice %4 {offsets = [1, 0, 0], sizes = [8, 16, 4], strides = [1, 1, 1]} : vector<10x18x4xf32> to vector<8x16x4xf32>
    %24 = vector.shape_cast %23 : vector<8x16x4xf32> to vector<128x4xf32>
    %25 = vector.extract_strided_slice %5 {offsets = [3, 0, 0], sizes = [1, 4, 128], strides = [1, 1, 1]} : vector<9x4x128xf32> to vector<1x4x128xf32>
    %26 = vector.shape_cast %25 : vector<1x4x128xf32> to vector<4x128xf32>
    %cst_7 = arith.constant dense<0.000000e+00> : vector<128x128xf32>
    %27 = tpu.matmul %24, %26, %cst_7 {dimension_numbers = #tpu.dot_dimension_numbers<[1], [0], [0], [1], [0, 0, 1, 1], [], []>} : vector<128x4xf32>, vector<4x128xf32>, vector<128x128xf32> -> vector<128x128xf32>
    %28 = arith.addf %22, %27 : vector<128x128xf32>
    %29 = vector.extract_strided_slice %4 {offsets = [1, 1, 0], sizes = [8, 16, 4], strides = [1, 1, 1]} : vector<10x18x4xf32> to vector<8x16x4xf32>
    %30 = vector.shape_cast %29 : vector<8x16x4xf32> to vector<128x4xf32>
    %31 = vector.extract_strided_slice %5 {offsets = [4, 0, 0], sizes = [1, 4, 128], strides = [1, 1, 1]} : vector<9x4x128xf32> to vector<1x4x128xf32>
    %32 = vector.shape_cast %31 : vector<1x4x128xf32> to vector<4x128xf32>
    %cst_8 = arith.constant dense<0.000000e+00> : vector<128x128xf32>
    %33 = tpu.matmul %30, %32, %cst_8 {dimension_numbers = #tpu.dot_dimension_numbers<[1], [0], [0], [1], [0, 0, 1, 1], [], []>} : vector<128x4xf32>, vector<4x128xf32>, vector<128x128xf32> -> vector<128x128xf32>
    %34 = arith.addf %28, %33 : vector<128x128xf32>
    %35 = vector.extract_strided_slice %4 {offsets = [1, 2, 0], sizes = [8, 16, 4], strides = [1, 1, 1]} : vector<10x18x4xf32> to vector<8x16x4xf32>
    %36 = vector.shape_cast %35 : vector<8x16x4xf32> to vector<128x4xf32>
    %37 = vector.extract_strided_slice %5 {offsets = [5, 0, 0], sizes = [1, 4, 128], strides = [1, 1, 1]} : vector<9x4x128xf32> to vector<1x4x128xf32>
    %38 = vector.shape_cast %37 : vector<1x4x128xf32> to vector<4x128xf32>
    %cst_9 = arith.constant dense<0.000000e+00> : vector<128x128xf32>
    %39 = tpu.matmul %36, %38, %cst_9 {dimension_numbers = #tpu.dot_dimension_numbers<[1], [0], [0], [1], [0, 0, 1, 1], [], []>} : vector<128x4xf32>, vector<4x128xf32>, vector<128x128xf32> -> vector<128x128xf32>
    %40 = arith.addf %34, %39 : vector<128x128xf32>
    %41 = vector.extract_strided_slice %4 {offsets = [2, 0, 0], sizes = [8, 16, 4], strides = [1, 1, 1]} : vector<10x18x4xf32> to vector<8x16x4xf32>
    %42 = vector.shape_cast %41 : vector<8x16x4xf32> to vector<128x4xf32>
    %43 = vector.extract_strided_slice %5 {offsets = [6, 0, 0], sizes = [1, 4, 128], strides = [1, 1, 1]} : vector<9x4x128xf32> to vector<1x4x128xf32>
    %44 = vector.shape_cast %43 : vector<1x4x128xf32> to vector<4x128xf32>
    %cst_10 = arith.constant dense<0.000000e+00> : vector<128x128xf32>
    %45 = tpu.matmul %42, %44, %cst_10 {dimension_numbers = #tpu.dot_dimension_numbers<[1], [0], [0], [1], [0, 0, 1, 1], [], []>} : vector<128x4xf32>, vector<4x128xf32>, vector<128x128xf32> -> vector<128x128xf32>
    %46 = arith.addf %40, %45 : vector<128x128xf32>
    %47 = vector.extract_strided_slice %4 {offsets = [2, 1, 0], sizes = [8, 16, 4], strides = [1, 1, 1]} : vector<10x18x4xf32> to vector<8x16x4xf32>
    %48 = vector.shape_cast %47 : vector<8x16x4xf32> to vector<128x4xf32>
    %49 = vector.extract_strided_slice %5 {offsets = [7, 0, 0], sizes = [1, 4, 128], strides = [1, 1, 1]} : vector<9x4x128xf32> to vector<1x4x128xf32>
    %50 = vector.shape_cast %49 : vector<1x4x128xf32> to vector<4x128xf32>
    %cst_11 = arith.constant dense<0.000000e+00> : vector<128x128xf32>
    %51 = tpu.matmul %48, %50, %cst_11 {dimension_numbers = #tpu.dot_dimension_numbers<[1], [0], [0], [1], [0, 0, 1, 1], [], []>} : vector<128x4xf32>, vector<4x128xf32>, vector<128x128xf32> -> vector<128x128xf32>
    %52 = arith.addf %46, %51 : vector<128x128xf32>
    %53 = vector.extract_strided_slice %4 {offsets = [2, 2, 0], sizes = [8, 16, 4], strides = [1, 1, 1]} : vector<10x18x4xf32> to vector<8x16x4xf32>
    %54 = vector.shape_cast %53 : vector<8x16x4xf32> to vector<128x4xf32>
    %55 = vector.extract_strided_slice %5 {offsets = [8, 0, 0], sizes = [1, 4, 128], strides = [1, 1, 1]} : vector<9x4x128xf32> to vector<1x4x128xf32>
    %56 = vector.shape_cast %55 : vector<1x4x128xf32> to vector<4x128xf32>
    %cst_12 = arith.constant dense<0.000000e+00> : vector<128x128xf32>
    %57 = tpu.matmul %54, %56, %cst_12 {dimension_numbers = #tpu.dot_dimension_numbers<[1], [0], [0], [1], [0, 0, 1, 1], [], []>} : vector<128x4xf32>, vector<4x128xf32>, vector<128x128xf32> -> vector<128x128xf32>
    %58 = arith.addf %52, %57 : vector<128x128xf32>
    %cst_13 = arith.constant dense<0.000000e+00> : vector<128xf32>
    %59 = vector.multi_reduction <add>, %58, %cst_13 [0] : vector<128x128xf32> to vector<128xf32>
    %60 = vector.shape_cast %59 : vector<128xf32> to vector<1x128xf32>
    %61 = arith.mulf %58, %58 : vector<128x128xf32>
    %cst_14 = arith.constant dense<0.000000e+00> : vector<128xf32>
    %62 = vector.multi_reduction <add>, %61, %cst_14 [0] : vector<128x128xf32> to vector<128xf32>
    %63 = vector.shape_cast %62 : vector<128xf32> to vector<1x128xf32>
    %64 = tpu.concatenate %60, %63 in 0 : vector<1x128xf32>, vector<1x128xf32> -> vector<2x128xf32>
    %65 = vector.shape_cast %64 : vector<2x128xf32> to vector<1x1x2x128xf32>
    %c0_15 = arith.constant 0 : index
    %c0_16 = arith.constant 0 : index
    %c0_17 = arith.constant 0 : index
    %c0_18 = arith.constant 0 : index
    %66 = vector.load %arg4[%c0_15, %c0_16, %c0_17, %c0_18] : memref<1x1x2x128xf32, #tpu.memory_space<vmem>>, vector<1x1x2x128xf32>
    tpu.vector_store %arg4[%c0_15, %c0_16, %c0_17, %c0_18], %65 {strides = array<i32>} : memref<1x1x2x128xf32, #tpu.memory_space<vmem>>, vector<1x1x2x128xf32>,
    return
  }
  func.func @transform_0(%arg0: i32, %arg1: i32) -> (i32, i32, i32, i32) {
    %c0_i32 = arith.constant 0 : i32
    %c0_i32_0 = arith.constant 0 : i32
    %c0_i32_1 = arith.constant 0 : i32
    %c0_i32_2 = arith.constant 0 : i32
    return %arg0, %c0_i32, %c0_i32_0, %c0_i32_1 : i32, i32, i32, i32
  }
  func.func @transform_1(%arg0: i32, %arg1: i32) -> (i32, i32, i32) {
    %c0_i32 = arith.constant 0 : i32
    %c0_i32_0 = arith.constant 0 : i32
    %c0_i32_1 = arith.constant 0 : i32
    %c0_i32_2 = arith.constant 0 : i32
    return %c0_i32, %c0_i32_0, %c0_i32_1 : i32, i32, i32
  }
  func.func @transform_2(%arg0: i32, %arg1: i32) -> (i32, i32, i32, i32) {
    %c0_i32 = arith.constant 0 : i32
    %c0_i32_0 = arith.constant 0 : i32
    %c0_i32_1 = arith.constant 0 : i32
    return %arg0, %arg1, %c0_i32, %c0_i32_0 : i32, i32, i32, i32
  }
}

</mosaic_0001>

<llo_original>
// kernel: tpu_custom_call.1
$region0: #{tpu_custom_call.1}
  #allocation0 [shape = 'u32[]', space=smem, size = 0x4, offset = 0x4, fixed_abs, tag = 'smem constant byte address 0x4 - core index']
  #allocation1 [shape = 'u32[144,128]{1,0:T(1,128)}', space=vmem, size = 0x12000, scoped, tag = 'internal scratch']
  %s0 = inlined_call_operand.vmem [shape: f32[2,18,18,4], index: 0, kind: input, shape index: {}]
  %s1 = inlined_call_operand.vmem [shape: f32[9,4,128], index: 1, kind: input, shape index: {}]
  %s2 = inlined_call_operand.hbm [shape: f32[2,2,2,128], index: 2, kind: output, shape index: {}]
  %s3 = sld [smem:[#allocation0]]
  $region41: #{tpu_custom_call.1} parent=0
    _
  %s5 = ssub.s32 1, %s3
  %s6 = scalar_select 0, %s5, %s3
  $region1: #{tpu_custom_call.1} parent=0
    #allocation2 [shape = 'u8[2048]{0}', space=vmem, size = 0x800, scoped, tag = 'output window, operand 0']
    #allocation3 [shape = 's32[2]{0}', space=sflag, size = 0x8, scoped, tag = 'scoped memory for tpu_custom_call.1']
    %7 = vsyncpa [#allocation3], 0
    %s8 = scalar_lea.sflag [#allocation3], 1
    %9 = vsyncpa %s8, 0
    loop: start=0, step=1, limit=6
    $region2: #{tpu_custom_call.1} parent=1 // loop_pre_header
      _
    $region3: #{tpu_custom_call.1} parent=1 // loop_header
      %s11 = sphi 0, %s15
      %p12 = scmp.ge.s32.totalorder %s11, 6
      %s18 = sphi 0, %s30
      %s19 = sphi 0, %s26
      %s20 = sphi 0, %s18
      %s21 = sphi 0, %s19
      %s22 = sphi 0, %s20
      %s23 = sphi 0, %s21
      %s33 = sphi 0, %s35
      %s36 = sphi 0, %s33
      %s37 = sphi 0, %s36
      %s53 = sphi 0, %s37
      %s57 = sphi 0, %s57
      %s59 = sphi 0, %s57
      %s60 = sphi 0, %s59
      %s74 = sphi 0, %s60
      %s82 = sphi 0, %s84
      %s85 = sphi 0, %s82
      %s86 = sphi 0, %s85
      %s102 = sphi 0, %s86
    $region4: #{tpu_custom_call.1} parent=1 // loop_header_branch
      %14 = sbr.rel (%p12) target = $region8
    $region5: #{tpu_custom_call.1} parent=1 // loop_body
      %s16 = ssub.s32 %s11, 1
      %s17 = ssub.s32 %s11, 2
      %s24 = sadd.s32 1, %s19
      %p25 = scmp.ge.s32.totalorder %s24, 2
      %s26 = scalar_select %p25, 0, %s24
      %s27 = sadd.s32 1, %s18
      %s28 = scalar_select %p25, %s27, %s18
      %p29 = scmp.ge.s32.totalorder %s28, 2
      %s30 = scalar_select %p29, 0, %s28
      %s31 = ssub.s32 %s18, %s30
      %p32 = scmp.eq.s32.totalorder %s31, 0
      %s34 = sadd.s32 %s33, 1
      %s35 = scalar_select %p32, %s33, %s34
      %p38 = pneg %p32
      %p39 = scmp.eq.s32.totalorder %s11, 3
      %p40 = por %p38, %p39
      %p41 = scmp.ne.s32.totalorder %s33, %s36
      %p42 = scmp.eq.s32.totalorder %s11, 0
      %p43 = por %p41, %p42
      %p44 = scmp.ne.s32.totalorder %s33, %s36
      %p45 = scmp.eq.s32.totalorder %s16, 3
      %p46 = por %p44, %p45
      %p47 = scmp.ne.s32.totalorder %s36, %s37
      %p48 = scmp.eq.s32.totalorder %s16, 0
      %p49 = por %p47, %p48
      %p50 = scmp.ne.s32.totalorder %s36, %s37
      %p51 = scmp.eq.s32.totalorder %s17, 3
      %p52 = por %p50, %p51
      %p54 = scmp.ne.s32.totalorder %s37, %s53
      %p55 = scmp.eq.s32.totalorder %s17, 0
      %p56 = por %p54, %p55
      %s58 = sadd.s32 %s57, 1
      %p61 = scmp.eq.s32.totalorder %s11, 3
      %p62 = scmp.ne.s32.totalorder %s57, %s59
      %p63 = scmp.eq.s32.totalorder %s11, 0
      %p64 = por %p62, %p63
      %p65 = scmp.ne.s32.totalorder %s57, %s59
      %p66 = scmp.eq.s32.totalorder %s16, 3
      %p67 = por %p65, %p66
      %p68 = scmp.ne.s32.totalorder %s59, %s60
      %p69 = scmp.eq.s32.totalorder %s16, 0
      %p70 = por %p68, %p69
      %p71 = scmp.ne.s32.totalorder %s59, %s60
      %p72 = scmp.eq.s32.totalorder %s17, 3
      %p73 = por %p71, %p72
      %p75 = scmp.ne.s32.totalorder %s60, %s74
      %p76 = scmp.eq.s32.totalorder %s17, 0
      %p77 = por %p75, %p76
      %s78 = ssub.s32 %s18, %s30
      %s79 = ssub.s32 %s19, %s26
      %s80 = sor.u32 %s78, %s79
      %p81 = scmp.eq.s32.totalorder %s80, 0
      %s83 = sadd.s32 %s82, 1
      %s84 = scalar_select %p81, %s82, %s83
      %p87 = pneg %p81
      %p88 = scmp.eq.s32.totalorder %s11, 3
      %p89 = por %p87, %p88
      %p90 = scmp.ne.s32.totalorder %s82, %s85
      %p91 = scmp.eq.s32.totalorder %s11, 0
      %p92 = por %p90, %p91
      %p93 = scmp.ne.s32.totalorder %s82, %s85
      %p94 = scmp.eq.s32.totalorder %s16, 3
      %p95 = por %p93, %p94
      %p96 = scmp.ne.s32.totalorder %s85, %s86
      %p97 = scmp.eq.s32.totalorder %s16, 0
      %p98 = por %p96, %p97
      %p99 = scmp.ne.s32.totalorder %s85, %s86
      %p100 = scmp.eq.s32.totalorder %s17, 3
      %p101 = por %p99, %p100
      %p103 = scmp.ne.s32.totalorder %s86, %s102
      %p104 = scmp.eq.s32.totalorder %s17, 0
      %p105 = por %p103, %p104
      %p106 = scmp.le.s32.totalorder 1, %s11
      %p107 = scmp.lt.s32.totalorder %s11, 5
      %p108 = pnand %p106, %p107
      %p109 = pneg %p108
      // Predicated region
      $region9: #{tpu_custom_call.1} parent=5 // pred_check
        _
      $region10: #{tpu_custom_call.1} parent=5 // pred_check_branch
        %111 = sbr.rel (%p108) target = $region12
      $region11: #{tpu_custom_call.1} parent=5 // pred_region
        %s112 = ssub.s32 %s11, 1
        // Predicated region
        $region13: #{tpu_custom_call.1} parent=11 // pred_check
          %p113 = pneg %p70
        $region14: #{tpu_custom_call.1} parent=11 // pred_check_branch
          %115 = sbr.rel (%p113) target = $region16
        $region15: #{tpu_custom_call.1} parent=11 // pred_region
          _
        $region16: #{tpu_custom_call.1} parent=11 // pred_fallthru
          _
      $region12: #{tpu_custom_call.1} parent=5 // pred_fallthru
        _
      %p116 = scmp.lt.s32.totalorder %s11, 4
      // Predicated region
      $region17: #{tpu_custom_call.1} parent=5 // pred_check
        %p117 = pneg %p116
      $region18: #{tpu_custom_call.1} parent=5 // pred_check_branch
        %119 = sbr.rel (%p117) target = $region20
      $region19: #{tpu_custom_call.1} parent=5 // pred_region
        // Predicated region
        $region21: #{tpu_custom_call.1} parent=19 // pred_check
          %p120 = pneg %p43
        $region22: #{tpu_custom_call.1} parent=19 // pred_check_branch
          %122 = sbr.rel (%p120) target = $region24
        $region23: #{tpu_custom_call.1} parent=19 // pred_region
          %p123 = scmp.lt.s32.totalorder %s18, 1
          %s124 = scalar_select %p123, %s18, 1
          %s125 = smul.addr %s124, 54
          %s126 = smul.addr %s125, 8
          %s127 = scalar_lea.vmem %s0, %s126
        $region24: #{tpu_custom_call.1} parent=19 // pred_fallthru
          _
      $region20: #{tpu_custom_call.1} parent=5 // pred_fallthru
        _
      %p128 = scmp.le.s32.totalorder 1, %s11
      %p129 = scmp.lt.s32.totalorder %s11, 5
      %p130 = pnand %p128, %p129
      %p131 = pneg %p130
      // Predicated region
      $region25: #{tpu_custom_call.1} parent=5 // pred_check
        _
      $region26: #{tpu_custom_call.1} parent=5 // pred_check_branch
        %133 = sbr.rel (%p130) target = $region28
      $region27: #{tpu_custom_call.1} parent=5 // pred_region
        %s134 = ssub.s32 %s11, 1
        %p135 = scmp.lt.s32.totalorder %s20, 1
        %s136 = scalar_select %p135, %s20, 1
        %s137 = smul.addr %s136, 54
        %s138 = smul.addr %s137, 8
        %s139 = scalar_lea.vmem %s0, %s138
        %p140 = pneg %p49
        %p141 = pneg %p46
        %p142 = pneg %p70
        %p143 = pneg %p67
        %p144 = pneg %p98
        %p145 = pneg %p95
        %s146 = sand.u32 %s85, 1
        %s147 = scalar_lea.sflag [#allocation3], %s146
        %s148 = sand.u32 %s85, 1
        %s149 = smul.addr %s148, 2
        %s150 = scalar_lea.vmem [#allocation2], %s149
        %p151 = scmp.lt.s32.totalorder %s20, 1
        %s152 = scalar_select %p151, %s20, 1
        %s153 = smul.addr %s152, 54
        %s154 = smul.addr %s153, 8
        %s155 = scalar_lea.vmem %s0, %s154
        %s156 = smul.u32 %s21, 8
        %s157 = smul.u32 %s156, 24
        %s158 = scalar_lea.vmem %s155, %s157
        %v159 = vld [vmem:[%s158] sm:$0xff]
        %v160 = vld [vmem:[%s158 + $0x8] sm:$0xff]
        %v161 = vld [vmem:[%s158 + $0x10] sm:$0x3]
        %v162 = vld [vmem:[%s158 + $0x18] sm:$0xff]
        %v163 = vld [vmem:[%s158 + $0x20] sm:$0xff]
        %v164 = vld [vmem:[%s158 + $0x28] sm:$0x3]
        %v165 = vld [vmem:[%s158 + $0x30] sm:$0xff]
        %v166 = vld [vmem:[%s158 + $0x38] sm:$0xff]
        %v167 = vld [vmem:[%s158 + $0x40] sm:$0x3]
        %v168 = vld [vmem:[%s158 + $0x48] sm:$0xff]
        %v169 = vld [vmem:[%s158 + $0x50] sm:$0xff]
        %v170 = vld [vmem:[%s158 + $0x58] sm:$0x3]
        %v171 = vld [vmem:[%s158 + $0x60] sm:$0xff]
        %v172 = vld [vmem:[%s158 + $0x68] sm:$0xff]
        %v173 = vld [vmem:[%s158 + $0x70] sm:$0x3]
        %v174 = vld [vmem:[%s158 + $0x78] sm:$0xff]
        %v175 = vld [vmem:[%s158 + $0x80] sm:$0xff]
        %v176 = vld [vmem:[%s158 + $0x88] sm:$0x3]
        %v177 = vld [vmem:[%s158 + $0x90] sm:$0xff]
        %v178 = vld [vmem:[%s158 + $0x98] sm:$0xff]
        %v179 = vld [vmem:[%s158 + $0xa0] sm:$0x3]
        %v180 = vld [vmem:[%s158 + $0xa8] sm:$0xff]
        %v181 = vld [vmem:[%s158 + $0xb0] sm:$0xff]
        %v182 = vld [vmem:[%s158 + $0xb8] sm:$0x3]
        %v183 = vld [vmem:[%s158 + $0xc0] sm:$0xff]
        %v184 = vld [vmem:[%s158 + $0xc8] sm:$0xff]
        %v185 = vld [vmem:[%s158 + $0xd0] sm:$0x3]
        %v186 = vld [vmem:[%s158 + $0xd8] sm:$0xff]
        %v187 = vld [vmem:[%s158 + $0xe0] sm:$0xff]
        %v188 = vld [vmem:[%s158 + $0xe8] sm:$0x3]
        %v189 = vld [vmem:[%s1] sm:$0xf]
        %v190 = vld [vmem:[%s1 + $0x4] sm:$0xf]
        %v191 = vld [vmem:[%s1 + $0x8] sm:$0xf]
        %v192 = vld [vmem:[%s1 + $0xc] sm:$0xf]
        %v193 = vld [vmem:[%s1 + $0x10] sm:$0xf]
        %v194 = vld [vmem:[%s1 + $0x14] sm:$0xf]
        %v195 = vld [vmem:[%s1 + $0x18] sm:$0xf]
        %v196 = vld [vmem:[%s1 + $0x1c] sm:$0xf]
        %v197 = vld [vmem:[%s1 + $0x20] sm:$0xf]
        %vm222 = vcmask 1046528
        %v223 = vrot.slane %v159, 1
        %v224 = vrot.slane %v160, 1
        %v225 = vsel %vm222, %v223, %v224
        %v226 = vrot.slane %v161, 1
        %v227 = vsel %vm222, %v224, %v226
        %v228 = vrot.slane %v162, 1
        %v229 = vrot.slane %v163, 1
        %v230 = vsel %vm222, %v228, %v229
        %v231 = vrot.slane %v164, 1
        %v232 = vsel %vm222, %v229, %v231
        %v233 = vrot.slane %v165, 1
        %v234 = vrot.slane %v166, 1
        %v235 = vsel %vm222, %v233, %v234
        %v236 = vrot.slane %v167, 1
        %v237 = vsel %vm222, %v234, %v236
        %v238 = vrot.slane %v168, 1
        %v239 = vrot.slane %v169, 1
        %v240 = vsel %vm222, %v238, %v239
        %v241 = vrot.slane %v170, 1
        %v242 = vsel %vm222, %v239, %v241
        %v243 = vrot.slane %v171, 1
        %v244 = vrot.slane %v172, 1
        %v245 = vsel %vm222, %v243, %v244
        %v246 = vrot.slane %v173, 1
        %v247 = vsel %vm222, %v244, %v246
        %v248 = vrot.slane %v174, 1
        %v249 = vrot.slane %v175, 1
        %v250 = vsel %vm222, %v248, %v249
        %v251 = vrot.slane %v176, 1
        %v252 = vsel %vm222, %v249, %v251
        %v253 = vrot.slane %v177, 1
        %v254 = vrot.slane %v178, 1
        %v255 = vsel %vm222, %v253, %v254
        %v256 = vrot.slane %v179, 1
        %v257 = vsel %vm222, %v254, %v256
        %v258 = vrot.slane %v180, 1
        %v259 = vrot.slane %v181, 1
        %v260 = vsel %vm222, %v258, %v259
        %v261 = vrot.slane %v182, 1
        %v262 = vsel %vm222, %v259, %v261
        %vm263 = vcmask 31744
        %v264 = vsel %vm263, %v225, 0
        %v266 = vsel %vm263, %v227, 0
        %v268 = vsel %vm263, %v230, 0
        %v270 = vsel %vm263, %v232, 0
        %v272 = vsel %vm263, %v235, 0
        %v274 = vsel %vm263, %v237, 0
        %v276 = vsel %vm263, %v240, 0
        %v278 = vsel %vm263, %v242, 0
        %v280 = vsel %vm263, %v245, 0
        %v282 = vsel %vm263, %v247, 0
        %v284 = vsel %vm263, %v250, 0
        %v286 = vsel %vm263, %v252, 0
        %v288 = vsel %vm263, %v255, 0
        %v290 = vsel %vm263, %v257, 0
        %v292 = vsel %vm263, %v260, 0
        %v294 = vsel %vm263, %v262, 0
        %vm296 = vcmask 1043456
        %v298 = vsel %vm296, %v190, 0
        %300 = vmatprep.subr.mxu0 0.0
        %301 = vmatpush1.msra.mxu0 %v298
        %302 = vmatprep.subr.mxu0 0.0
        %303 = vmatpush1.msra.mxu0 0.0
        %304 = vmatprep.subr.mxu0 0.0
        %305 = vmatpush1.msra.mxu0 0.0
        %306 = vmatprep.subr.mxu0 0.0
        %307 = vmatpush1.msra.mxu0 0.0
        %308 = vmatprep.subr.mxu0 0.0
        %309 = vmatpush1.msra.mxu0 0.0
        %310 = vmatprep.subr.mxu0 0.0
        %311 = vmatpush1.msra.mxu0 0.0
        %312 = vmatprep.subr.mxu0 0.0
        %313 = vmatpush1.msra.mxu0 0.0
        %314 = vmatprep.subr.mxu0 0.0
        %315 = vmatpush1.msra.mxu0 0.0
        %316 = vmatprep.subr.mxu0 0.0
        %317 = vmatpush1.msra.mxu0 0.0
        %318 = vmatprep.subr.mxu0 0.0
        %319 = vmatpush1.msra.mxu0 0.0
        %320 = vmatprep.subr.mxu0 0.0
        %321 = vmatpush1.msra.mxu0 0.0
        %322 = vmatprep.subr.mxu0 0.0
        %323 = vmatpush1.msra.mxu0 0.0
        %324 = vmatprep.subr.mxu0 0.0
        %325 = vmatpush1.msra.mxu0 0.0
        %326 = vmatprep.subr.mxu0 0.0
        %327 = vmatpush1.msra.mxu0 0.0
        %328 = vmatprep.subr.mxu0 0.0
        %329 = vmatpush1.msra.mxu0 0.0
        %330 = vmatprep.subr.mxu0 0.0
        %331 = vmatpush1.msra.mxu0 0.0
        %332 = vmatprep.subr.mxu0 0.0
        %333 = vmatpush1.msra.mxu0 0.0
        %334 = vmatprep.subr.mxu0 0.0
        %335 = vmatpush1.msra.mxu0 0.0
        %336 = vmatprep.subr.mxu0 0.0
        %337 = vmatpush1.msra.mxu0 0.0
        %338 = vmatprep.subr.mxu0 0.0
        %339 = vmatpush1.msra.mxu0 0.0
        %340 = vmatprep.subr.mxu0 0.0
        %341 = vmatpush1.msra.mxu0 0.0
        %342 = vmatprep.subr.mxu0 0.0
        %343 = vmatpush1.msra.mxu0 0.0
        %344 = vmatprep.subr.mxu0 0.0
        %345 = vmatpush1.msra.mxu0 0.0
        %346 = vmatprep.subr.mxu0 0.0
        %347 = vmatpush1.msra.mxu0 0.0
        %348 = vmatprep.subr.mxu0 0.0
        %349 = vmatpush1.msra.mxu0 0.0
        %350 = vmatprep.subr.mxu0 0.0
        %351 = vmatpush1.msra.mxu0 0.0
        %352 = vmatprep.subr.mxu0 0.0
        %353 = vmatpush1.msra.mxu0 0.0
        %354 = vmatprep.subr.mxu0 0.0
        %355 = vmatpush1.msra.mxu0 0.0
        %356 = vmatprep.subr.mxu0 0.0
        %357 = vmatpush1.msra.mxu0 0.0
        %358 = vmatprep.subr.mxu0 0.0
        %359 = vmatpush1.msra.mxu0 0.0
        %360 = vmatprep.subr.mxu0 0.0
        %361 = vmatpush1.msra.mxu0 0.0
        %362 = vmatprep.subr.mxu0 0.0
        %363 = vmatpush1.msra.mxu0 0.0
        %364 = vmatprep.mubr.f32.mxu0 0.0
        %365 = vmatmul.mubr.f32.gmra.mrb[0].mxu0 %v264
        %v366 = vpop.f32.mrb[0].mxu0
        %v367 = vadd.f32 0.0, %v366
        %v368 = vpop.f32.mrb[0].mxu0
        %369 = vmatprep.mubr.f32.mxu0 0.0
        %370 = vmatmul.mubr.f32.gmra.mrb[0].mxu0 %v266
        %v371 = vpop.f32.mrb[0].mxu0
        %v372 = vadd.f32 0.0, %v371
        %v373 = vpop.f32.mrb[0].mxu0
        %374 = vmatprep.mubr.f32.mxu0 0.0
        %375 = vmatmul.mubr.f32.gmra.mrb[0].mxu0 %v268
        %v376 = vpop.f32.mrb[0].mxu0
        %v377 = vadd.f32 0.0, %v376
        %v378 = vpop.f32.mrb[0].mxu0
        %379 = vmatprep.mubr.f32.mxu0 0.0
        %380 = vmatmul.mubr.f32.gmra.mrb[0].mxu0 %v270
        %v381 = vpop.f32.mrb[0].mxu0
        %v382 = vadd.f32 0.0, %v381
        %v383 = vpop.f32.mrb[0].mxu0
        %384 = vmatprep.mubr.f32.mxu0 0.0
        %385 = vmatmul.mubr.f32.gmra.mrb[0].mxu0 %v272
        %v386 = vpop.f32.mrb[0].mxu0
        %v387 = vadd.f32 0.0, %v386
        %v388 = vpop.f32.mrb[0].mxu0
        %389 = vmatprep.mubr.f32.mxu0 0.0
        %390 = vmatmul.mubr.f32.gmra.mrb[0].mxu0 %v274
        %v391 = vpop.f32.mrb[0].mxu0
        %v392 = vadd.f32 0.0, %v391
        %v393 = vpop.f32.mrb[0].mxu0
        %394 = vmatprep.mubr.f32.mxu0 0.0
        %395 = vmatmul.mubr.f32.gmra.mrb[0].mxu0 %v276
        %v396 = vpop.f32.mrb[0].mxu0
        %v397 = vadd.f32 0.0, %v396
        %v398 = vpop.f32.mrb[0].mxu0
        %399 = vmatprep.mubr.f32.mxu0 0.0
        %400 = vmatmul.mubr.f32.gmra.mrb[0].mxu0 %v278
        %v401 = vpop.f32.mrb[0].mxu0
        %v402 = vadd.f32 0.0, %v401
        %v403 = vpop.f32.mrb[0].mxu0
        %404 = vmatprep.mubr.f32.mxu0 0.0
        %405 = vmatmul.mubr.f32.gmra.mrb[0].mxu0 %v280
        %v406 = vpop.f32.mrb[0].mxu0
        %v407 = vadd.f32 0.0, %v406
        %v408 = vpop.f32.mrb[0].mxu0
        %409 = vmatprep.mubr.f32.mxu0 0.0
        %410 = vmatmul.mubr.f32.gmra.mrb[0].mxu0 %v282
        %v411 = vpop.f32.mrb[0].mxu0
        %v412 = vadd.f32 0.0, %v411
        %v413 = vpop.f32.mrb[0].mxu0
        %414 = vmatprep.mubr.f32.mxu0 0.0
        %415 = vmatmul.mubr.f32.gmra.mrb[0].mxu0 %v284
        %v416 = vpop.f32.mrb[0].mxu0
        %v417 = vadd.f32 0.0, %v416
        %v418 = vpop.f32.mrb[0].mxu0
        %419 = vmatprep.mubr.f32.mxu0 0.0
        %420 = vmatmul.mubr.f32.gmra.mrb[0].mxu0 %v286
        %v421 = vpop.f32.mrb[0].mxu0
        %v422 = vadd.f32 0.0, %v421
        %v423 = vpop.f32.mrb[0].mxu0
        %424 = vmatprep.mubr.f32.mxu0 0.0
        %425 = vmatmul.mubr.f32.gmra.mrb[0].mxu0 %v288
        %v426 = vpop.f32.mrb[0].mxu0
        %v427 = vadd.f32 0.0, %v426
        %v428 = vpop.f32.mrb[0].mxu0
        %429 = vmatprep.mubr.f32.mxu0 0.0
        %430 = vmatmul.mubr.f32.gmra.mrb[0].mxu0 %v290
        %v431 = vpop.f32.mrb[0].mxu0
        %v432 = vadd.f32 0.0, %v431
        %v433 = vpop.f32.mrb[0].mxu0
        %434 = vmatprep.mubr.f32.mxu0 0.0
        %435 = vmatmul.mubr.f32.gmra.mrb[0].mxu0 %v292
        %v436 = vpop.f32.mrb[0].mxu0
        %v437 = vadd.f32 0.0, %v436
        %v438 = vpop.f32.mrb[0].mxu0
        %439 = vmatprep.mubr.f32.mxu0 0.0
        %440 = vmatmul.mubr.f32.gmra.mrb[0].mxu0 %v294
        %v441 = vpop.f32.mrb[0].mxu0
        %v442 = vadd.f32 0.0, %v441
        %v443 = vpop.f32.mrb[0].mxu0
        %444 = vdwg.mxu0
        %v445 = vsel %vm263, %v159, 0
        %v447 = vsel %vm263, %v160, 0
        %v449 = vsel %vm263, %v162, 0
        %v451 = vsel %vm263, %v163, 0
        %v453 = vsel %vm263, %v165, 0
        %v455 = vsel %vm263, %v166, 0
        %v457 = vsel %vm263, %v168, 0
        %v459 = vsel %vm263, %v169, 0
        %v461 = vsel %vm263, %v171, 0
        %v463 = vsel %vm263, %v172, 0
        %v465 = vsel %vm263, %v174, 0
        %v467 = vsel %vm263, %v175, 0
        %v469 = vsel %vm263, %v177, 0
        %v471 = vsel %vm263, %v178, 0
        %v473 = vsel %vm263, %v180, 0
        %v475 = vsel %vm263, %v181, 0
        %v478 = vsel %vm296, %v189, 0
        %480 = vmatprep.subr.mxu0 0.0
        %481 = vmatpush1.msra.mxu0 %v478
        %482 = vmatprep.subr.mxu0 0.0
        %483 = vmatpush1.msra.mxu0 0.0
        %484 = vmatprep.subr.mxu0 0.0
        %485 = vmatpush1.msra.mxu0 0.0
        %486 = vmatprep.subr.mxu0 0.0
        %487 = vmatpush1.msra.mxu0 0.0
        %488 = vmatprep.subr.mxu0 0.0
        %489 = vmatpush1.msra.mxu0 0.0
        %490 = vmatprep.subr.mxu0 0.0
        %491 = vmatpush1.msra.mxu0 0.0
        %492 = vmatprep.subr.mxu0 0.0
        %493 = vmatpush1.msra.mxu0 0.0
        %494 = vmatprep.subr.mxu0 0.0
        %495 = vmatpush1.msra.mxu0 0.0
        %496 = vmatprep.subr.mxu0 0.0
        %497 = vmatpush1.msra.mxu0 0.0
        %498 = vmatprep.subr.mxu0 0.0
        %499 = vmatpush1.msra.mxu0 0.0
        %500 = vmatprep.subr.mxu0 0.0
        %501 = vmatpush1.msra.mxu0 0.0
        %502 = vmatprep.subr.mxu0 0.0
        %503 = vmatpush1.msra.mxu0 0.0
        %504 = vmatprep.subr.mxu0 0.0
        %505 = vmatpush1.msra.mxu0 0.0
        %506 = vmatprep.subr.mxu0 0.0
        %507 = vmatpush1.msra.mxu0 0.0
        %508 = vmatprep.subr.mxu0 0.0
        %509 = vmatpush1.msra.mxu0 0.0
        %510 = vmatprep.subr.mxu0 0.0
        %511 = vmatpush1.msra.mxu0 0.0
        %512 = vmatprep.subr.mxu0 0.0
        %513 = vmatpush1.msra.mxu0 0.0
        %514 = vmatprep.subr.mxu0 0.0
        %515 = vmatpush1.msra.mxu0 0.0
        %516 = vmatprep.subr.mxu0 0.0
        %517 = vmatpush1.msra.mxu0 0.0
        %518 = vmatprep.subr.mxu0 0.0
        %519 = vmatpush1.msra.mxu0 0.0
        %520 = vmatprep.subr.mxu0 0.0
        %521 = vmatpush1.msra.mxu0 0.0
        %522 = vmatprep.subr.mxu0 0.0
        %523 = vmatpush1.msra.mxu0 0.0
        %524 = vmatprep.subr.mxu0 0.0
        %525 = vmatpush1.msra.mxu0 0.0
        %526 = vmatprep.subr.mxu0 0.0
        %527 = vmatpush1.msra.mxu0 0.0
        %528 = vmatprep.subr.mxu0 0.0
        %529 = vmatpush1.msra.mxu0 0.0
        %530 = vmatprep.subr.mxu0 0.0
        %531 = vmatpush1.msra.mxu0 0.0
        %532 = vmatprep.subr.mxu0 0.0
        %533 = vmatpush1.msra.mxu0 0.0
        %534 = vmatprep.subr.mxu0 0.0
        %535 = vmatpush1.msra.mxu0 0.0
        %536 = vmatprep.subr.mxu0 0.0
        %537 = vmatpush1.msra.mxu0 0.0
        %538 = vmatprep.subr.mxu0 0.0
        %539 = vmatpush1.msra.mxu0 0.0
        %540 = vmatprep.subr.mxu0 0.0
        %541 = vmatpush1.msra.mxu0 0.0
        %542 = vmatprep.subr.mxu0 0.0
        %543 = vmatpush1.msra.mxu0 0.0
        %544 = vmatprep.mubr.f32.mxu0 0.0
        %545 = vmatmul.mubr.f32.gmra.mrb[0].mxu0 %v445
        %v546 = vpop.f32.mrb[0].mxu0
        %v547 = vadd.f32 %v367, %v546
        %v548 = vpop.f32.mrb[0].mxu0
        %549 = vmatprep.mubr.f32.mxu0 0.0
        %550 = vmatmul.mubr.f32.gmra.mrb[0].mxu0 %v447
        %v551 = vpop.f32.mrb[0].mxu0
        %v552 = vadd.f32 %v372, %v551
        %v553 = vpop.f32.mrb[0].mxu0
        %554 = vmatprep.mubr.f32.mxu0 0.0
        %555 = vmatmul.mubr.f32.gmra.mrb[0].mxu0 %v449
        %v556 = vpop.f32.mrb[0].mxu0
        %v557 = vadd.f32 %v377, %v556
        %v558 = vpop.f32.mrb[0].mxu0
        %559 = vmatprep.mubr.f32.mxu0 0.0
        %560 = vmatmul.mubr.f32.gmra.mrb[0].mxu0 %v451
        %v561 = vpop.f32.mrb[0].mxu0
        %v562 = vadd.f32 %v382, %v561
        %v563 = vpop.f32.mrb[0].mxu0
        %564 = vmatprep.mubr.f32.mxu0 0.0
        %565 = vmatmul.mubr.f32.gmra.mrb[0].mxu0 %v453
        %v566 = vpop.f32.mrb[0].mxu0
        %v567 = vadd.f32 %v387, %v566
        %v568 = vpop.f32.mrb[0].mxu0
        %569 = vmatprep.mubr.f32.mxu0 0.0
        %570 = vmatmul.mubr.f32.gmra.mrb[0].mxu0 %v455
        %v571 = vpop.f32.mrb[0].mxu0
        %v572 = vadd.f32 %v392, %v571
        %v573 = vpop.f32.mrb[0].mxu0
        %574 = vmatprep.mubr.f32.mxu0 0.0
        %575 = vmatmul.mubr.f32.gmra.mrb[0].mxu0 %v457
        %v576 = vpop.f32.mrb[0].mxu0
        %v577 = vadd.f32 %v397, %v576
        %v578 = vpop.f32.mrb[0].mxu0
        %579 = vmatprep.mubr.f32.mxu0 0.0
        %580 = vmatmul.mubr.f32.gmra.mrb[0].mxu0 %v459
        %v581 = vpop.f32.mrb[0].mxu0
        %v582 = vadd.f32 %v402, %v581
        %v583 = vpop.f32.mrb[0].mxu0
        %584 = vmatprep.mubr.f32.mxu0 0.0
        %585 = vmatmul.mubr.f32.gmra.mrb[0].mxu0 %v461
        %v586 = vpop.f32.mrb[0].mxu0
        %v587 = vadd.f32 %v407, %v586
        %v588 = vpop.f32.mrb[0].mxu0
        %589 = vmatprep.mubr.f32.mxu0 0.0
        %590 = vmatmul.mubr.f32.gmra.mrb[0].mxu0 %v463
        %v591 = vpop.f32.mrb[0].mxu0
        %v592 = vadd.f32 %v412, %v591
        %v593 = vpop.f32.mrb[0].mxu0
        %594 = vmatprep.mubr.f32.mxu0 0.0
        %595 = vmatmul.mubr.f32.gmra.mrb[0].mxu0 %v465
        %v596 = vpop.f32.mrb[0].mxu0
        %v597 = vadd.f32 %v417, %v596
        %v598 = vpop.f32.mrb[0].mxu0
        %599 = vmatprep.mubr.f32.mxu0 0.0
        %600 = vmatmul.mubr.f32.gmra.mrb[0].mxu0 %v467
        %v601 = vpop.f32.mrb[0].mxu0
        %v602 = vadd.f32 %v422, %v601
        %v603 = vpop.f32.mrb[0].mxu0
        %604 = vmatprep.mubr.f32.mxu0 0.0
        %605 = vmatmul.mubr.f32.gmra.mrb[0].mxu0 %v469
        %v606 = vpop.f32.mrb[0].mxu0
        %v607 = vadd.f32 %v427, %v606
        %v608 = vpop.f32.mrb[0].mxu0
        %609 = vmatprep.mubr.f32.mxu0 0.0
        %610 = vmatmul.mubr.f32.gmra.mrb[0].mxu0 %v471
        %v611 = vpop.f32.mrb[0].mxu0
        %v612 = vadd.f32 %v432, %v611
        %v613 = vpop.f32.mrb[0].mxu0
        %614 = vmatprep.mubr.f32.mxu0 0.0
        %615 = vmatmul.mubr.f32.gmra.mrb[0].mxu0 %v473
        %v616 = vpop.f32.mrb[0].mxu0
        %v617 = vadd.f32 %v437, %v616
        %v618 = vpop.f32.mrb[0].mxu0
        %619 = vmatprep.mubr.f32.mxu0 0.0
        %620 = vmatmul.mubr.f32.gmra.mrb[0].mxu0 %v475
        %v621 = vpop.f32.mrb[0].mxu0
        %v622 = vadd.f32 %v442, %v621
        %v623 = vpop.f32.mrb[0].mxu0
        %624 = vdwg.mxu0
        %vm625 = vcmask 1045504
        %v626 = vrot.slane %v159, 2
        %v627 = vrot.slane %v160, 2
        %v628 = vsel %vm625, %v626, %v627
        %v629 = vrot.slane %v161, 2
        %v630 = vsel %vm625, %v627, %v629
        %v631 = vrot.slane %v162, 2
        %v632 = vrot.slane %v163, 2
        %v633 = vsel %vm625, %v631, %v632
        %v634 = vrot.slane %v164, 2
        %v635 = vsel %vm625, %v632, %v634
        %v636 = vrot.slane %v165, 2
        %v637 = vrot.slane %v166, 2
        %v638 = vsel %vm625, %v636, %v637
        %v639 = vrot.slane %v167, 2
        %v640 = vsel %vm625, %v637, %v639
        %v641 = vrot.slane %v168, 2
        %v642 = vrot.slane %v169, 2
        %v643 = vsel %vm625, %v641, %v642
        %v644 = vrot.slane %v170, 2
        %v645 = vsel %vm625, %v642, %v644
        %v646 = vrot.slane %v171, 2
        %v647 = vrot.slane %v172, 2
        %v648 = vsel %vm625, %v646, %v647
        %v649 = vrot.slane %v173, 2
        %v650 = vsel %vm625, %v647, %v649
        %v651 = vrot.slane %v174, 2
        %v652 = vrot.slane %v175, 2
        %v653 = vsel %vm625, %v651, %v652
        %v654 = vrot.slane %v176, 2
        %v655 = vsel %vm625, %v652, %v654
        %v656 = vrot.slane %v177, 2
        %v657 = vrot.slane %v178, 2
        %v658 = vsel %vm625, %v656, %v657
        %v659 = vrot.slane %v179, 2
        %v660 = vsel %vm625, %v657, %v659
        %v661 = vrot.slane %v180, 2
        %v662 = vrot.slane %v181, 2
        %v663 = vsel %vm625, %v661, %v662
        %v664 = vrot.slane %v182, 2
        %v665 = vsel %vm625, %v662, %v664
        %v666 = vsel %vm263, %v628, 0
        %v668 = vsel %vm263, %v630, 0
        %v670 = vsel %vm263, %v633, 0
        %v672 = vsel %vm263, %v635, 0
        %v674 = vsel %vm263, %v638, 0
        %v676 = vsel %vm263, %v640, 0
        %v678 = vsel %vm263, %v643, 0
        %v680 = vsel %vm263, %v645, 0
        %v682 = vsel %vm263, %v648, 0
        %v684 = vsel %vm263, %v650, 0
        %v686 = vsel %vm263, %v653, 0
        %v688 = vsel %vm263, %v655, 0
        %v690 = vsel %vm263, %v658, 0
        %v692 = vsel %vm263, %v660, 0
        %v694 = vsel %vm263, %v663, 0
        %v696 = vsel %vm263, %v665, 0
        %v699 = vsel %vm296, %v191, 0
        %701 = vmatprep.subr.mxu0 0.0
        %702 = vmatpush1.msra.mxu0 %v699
        %703 = vmatprep.subr.mxu0 0.0
        %704 = vmatpush1.msra.mxu0 0.0
        %705 = vmatprep.subr.mxu0 0.0
        %706 = vmatpush1.msra.mxu0 0.0
        %707 = vmatprep.subr.mxu0 0.0
        %708 = vmatpush1.msra.mxu0 0.0
        %709 = vmatprep.subr.mxu0 0.0
        %710 = vmatpush1.msra.mxu0 0.0
        %711 = vmatprep.subr.mxu0 0.0
        %712 = vmatpush1.msra.mxu0 0.0
        %713 = vmatprep.subr.mxu0 0.0
        %714 = vmatpush1.msra.mxu0 0.0
        %715 = vmatprep.subr.mxu0 0.0
        %716 = vmatpush1.msra.mxu0 0.0
        %717 = vmatprep.subr.mxu0 0.0
        %718 = vmatpush1.msra.mxu0 0.0
        %719 = vmatprep.subr.mxu0 0.0
        %720 = vmatpush1.msra.mxu0 0.0
        %721 = vmatprep.subr.mxu0 0.0
        %722 = vmatpush1.msra.mxu0 0.0
        %723 = vmatprep.subr.mxu0 0.0
        %724 = vmatpush1.msra.mxu0 0.0
        %725 = vmatprep.subr.mxu0 0.0
        %726 = vmatpush1.msra.mxu0 0.0
        %727 = vmatprep.subr.mxu0 0.0
        %728 = vmatpush1.msra.mxu0 0.0
        %729 = vmatprep.subr.mxu0 0.0
        %730 = vmatpush1.msra.mxu0 0.0
        %731 = vmatprep.subr.mxu0 0.0
        %732 = vmatpush1.msra.mxu0 0.0
        %733 = vmatprep.subr.mxu0 0.0
        %734 = vmatpush1.msra.mxu0 0.0
        %735 = vmatprep.subr.mxu0 0.0
        %736 = vmatpush1.msra.mxu0 0.0
        %737 = vmatprep.subr.mxu0 0.0
        %738 = vmatpush1.msra.mxu0 0.0
        %739 = vmatprep.subr.mxu0 0.0
        %740 = vmatpush1.msra.mxu0 0.0
        %741 = vmatprep.subr.mxu0 0.0
        %742 = vmatpush1.msra.mxu0 0.0
        %743 = vmatprep.subr.mxu0 0.0
        %744 = vmatpush1.msra.mxu0 0.0
        %745 = vmatprep.subr.mxu0 0.0
        %746 = vmatpush1.msra.mxu0 0.0
        %747 = vmatprep.subr.mxu0 0.0
        %748 = vmatpush1.msra.mxu0 0.0
        %749 = vmatprep.subr.mxu0 0.0
        %750 = vmatpush1.msra.mxu0 0.0
        %751 = vmatprep.subr.mxu0 0.0
        %752 = vmatpush1.msra.mxu0 0.0
        %753 = vmatprep.subr.mxu0 0.0
        %754 = vmatpush1.msra.mxu0 0.0
        %755 = vmatprep.subr.mxu0 0.0
        %756 = vmatpush1.msra.mxu0 0.0
        %757 = vmatprep.subr.mxu0 0.0
        %758 = vmatpush1.msra.mxu0 0.0
        %759 = vmatprep.subr.mxu0 0.0
        %760 = vmatpush1.msra.mxu0 0.0
        %761 = vmatprep.subr.mxu0 0.0
        %762 = vmatpush1.msra.mxu0 0.0
        %763 = vmatprep.subr.mxu0 0.0
        %764 = vmatpush1.msra.mxu0 0.0
        %765 = vmatprep.mubr.f32.mxu0 0.0
        %766 = vmatmul.mubr.f32.gmra.mrb[0].mxu0 %v666
        %v767 = vpop.f32.mrb[0].mxu0
        %v768 = vadd.f32 0.0, %v767
        %v769 = vpop.f32.mrb[0].mxu0
        %770 = vmatprep.mubr.f32.mxu0 0.0
        %771 = vmatmul.mubr.f32.gmra.mrb[0].mxu0 %v668
        %v772 = vpop.f32.mrb[0].mxu0
        %v773 = vadd.f32 0.0, %v772
        %v774 = vpop.f32.mrb[0].mxu0
        %775 = vmatprep.mubr.f32.mxu0 0.0
        %776 = vmatmul.mubr.f32.gmra.mrb[0].mxu0 %v670
        %v777 = vpop.f32.mrb[0].mxu0
        %v778 = vadd.f32 0.0, %v777
        %v779 = vpop.f32.mrb[0].mxu0
        %780 = vmatprep.mubr.f32.mxu0 0.0
        %781 = vmatmul.mubr.f32.gmra.mrb[0].mxu0 %v672
        %v782 = vpop.f32.mrb[0].mxu0
        %v783 = vadd.f32 0.0, %v782
        %v784 = vpop.f32.mrb[0].mxu0
        %785 = vmatprep.mubr.f32.mxu0 0.0
        %786 = vmatmul.mubr.f32.gmra.mrb[0].mxu0 %v674
        %v787 = vpop.f32.mrb[0].mxu0
        %v788 = vadd.f32 0.0, %v787
        %v789 = vpop.f32.mrb[0].mxu0
        %790 = vmatprep.mubr.f32.mxu0 0.0
        %791 = vmatmul.mubr.f32.gmra.mrb[0].mxu0 %v676
        %v792 = vpop.f32.mrb[0].mxu0
        %v793 = vadd.f32 0.0, %v792
        %v794 = vpop.f32.mrb[0].mxu0
        %795 = vmatprep.mubr.f32.mxu0 0.0
        %796 = vmatmul.mubr.f32.gmra.mrb[0].mxu0 %v678
        %v797 = vpop.f32.mrb[0].mxu0
        %v798 = vadd.f32 0.0, %v797
        %v799 = vpop.f32.mrb[0].mxu0
        %800 = vmatprep.mubr.f32.mxu0 0.0
        %801 = vmatmul.mubr.f32.gmra.mrb[0].mxu0 %v680
        %v802 = vpop.f32.mrb[0].mxu0
        %v803 = vadd.f32 0.0, %v802
        %v804 = vpop.f32.mrb[0].mxu0
        %805 = vmatprep.mubr.f32.mxu0 0.0
        %806 = vmatmul.mubr.f32.gmra.mrb[0].mxu0 %v682
        %v807 = vpop.f32.mrb[0].mxu0
        %v808 = vadd.f32 0.0, %v807
        %v809 = vpop.f32.mrb[0].mxu0
        %810 = vmatprep.mubr.f32.mxu0 0.0
        %811 = vmatmul.mubr.f32.gmra.mrb[0].mxu0 %v684
        %v812 = vpop.f32.mrb[0].mxu0
        %v813 = vadd.f32 0.0, %v812
        %v814 = vpop.f32.mrb[0].mxu0
        %815 = vmatprep.mubr.f32.mxu0 0.0
        %816 = vmatmul.mubr.f32.gmra.mrb[0].mxu0 %v686
        %v817 = vpop.f32.mrb[0].mxu0
        %v818 = vadd.f32 0.0, %v817
        %v819 = vpop.f32.mrb[0].mxu0
        %820 = vmatprep.mubr.f32.mxu0 0.0
        %821 = vmatmul.mubr.f32.gmra.mrb[0].mxu0 %v688
        %v822 = vpop.f32.mrb[0].mxu0
        %v823 = vadd.f32 0.0, %v822
        %v824 = vpop.f32.mrb[0].mxu0
        %825 = vmatprep.mubr.f32.mxu0 0.0
        %826 = vmatmul.mubr.f32.gmra.mrb[0].mxu0 %v690
        %v827 = vpop.f32.mrb[0].mxu0
        %v828 = vadd.f32 0.0, %v827
        %v829 = vpop.f32.mrb[0].mxu0
        %830 = vmatprep.mubr.f32.mxu0 0.0
        %831 = vmatmul.mubr.f32.gmra.mrb[0].mxu0 %v692
        %v832 = vpop.f32.mrb[0].mxu0
        %v833 = vadd.f32 0.0, %v832
        %v834 = vpop.f32.mrb[0].mxu0
        %835 = vmatprep.mubr.f32.mxu0 0.0
        %836 = vmatmul.mubr.f32.gmra.mrb[0].mxu0 %v694
        %v837 = vpop.f32.mrb[0].mxu0
        %v838 = vadd.f32 0.0, %v837
        %v839 = vpop.f32.mrb[0].mxu0
        %840 = vmatprep.mubr.f32.mxu0 0.0
        %841 = vmatmul.mubr.f32.gmra.mrb[0].mxu0 %v696
        %v842 = vpop.f32.mrb[0].mxu0
        %v843 = vadd.f32 0.0, %v842
        %v844 = vpop.f32.mrb[0].mxu0
        %845 = vdwg.mxu0
        %v846 = vadd.f32 %v547, %v768
        %v847 = vadd.f32 %v552, %v773
        %v848 = vadd.f32 %v557, %v778
        %v849 = vadd.f32 %v562, %v783
        %v850 = vadd.f32 %v567, %v788
        %v851 = vadd.f32 %v572, %v793
        %v852 = vadd.f32 %v577, %v798
        %v853 = vadd.f32 %v582, %v803
        %v854 = vadd.f32 %v587, %v808
        %v855 = vadd.f32 %v592, %v813
        %v856 = vadd.f32 %v597, %v818
        %v857 = vadd.f32 %v602, %v823
        %v858 = vadd.f32 %v607, %v828
        %v859 = vadd.f32 %v612, %v833
        %v860 = vadd.f32 %v617, %v838
        %v861 = vadd.f32 %v622, %v843
        %v863 = vsel %vm263, %v183, 0
        %v866 = vsel %vm263, %v184, 0
        %v869 = vsel %vm296, %v192, 0
        %871 = vmatprep.subr.mxu0 0.0
        %872 = vmatpush1.msra.mxu0 %v869
        %873 = vmatprep.subr.mxu0 0.0
        %874 = vmatpush1.msra.mxu0 0.0
        %875 = vmatprep.subr.mxu0 0.0
        %876 = vmatpush1.msra.mxu0 0.0
        %877 = vmatprep.subr.mxu0 0.0
        %878 = vmatpush1.msra.mxu0 0.0
        %879 = vmatprep.subr.mxu0 0.0
        %880 = vmatpush1.msra.mxu0 0.0
        %881 = vmatprep.subr.mxu0 0.0
        %882 = vmatpush1.msra.mxu0 0.0
        %883 = vmatprep.subr.mxu0 0.0
        %884 = vmatpush1.msra.mxu0 0.0
        %885 = vmatprep.subr.mxu0 0.0
        %886 = vmatpush1.msra.mxu0 0.0
        %887 = vmatprep.subr.mxu0 0.0
        %888 = vmatpush1.msra.mxu0 0.0
        %889 = vmatprep.subr.mxu0 0.0
        %890 = vmatpush1.msra.mxu0 0.0
        %891 = vmatprep.subr.mxu0 0.0
        %892 = vmatpush1.msra.mxu0 0.0
        %893 = vmatprep.subr.mxu0 0.0
        %894 = vmatpush1.msra.mxu0 0.0
        %895 = vmatprep.subr.mxu0 0.0
        %896 = vmatpush1.msra.mxu0 0.0
        %897 = vmatprep.subr.mxu0 0.0
        %898 = vmatpush1.msra.mxu0 0.0
        %899 = vmatprep.subr.mxu0 0.0
        %900 = vmatpush1.msra.mxu0 0.0
        %901 = vmatprep.subr.mxu0 0.0
        %902 = vmatpush1.msra.mxu0 0.0
        %903 = vmatprep.subr.mxu0 0.0
        %904 = vmatpush1.msra.mxu0 0.0
        %905 = vmatprep.subr.mxu0 0.0
        %906 = vmatpush1.msra.mxu0 0.0
        %907 = vmatprep.subr.mxu0 0.0
        %908 = vmatpush1.msra.mxu0 0.0
        %909 = vmatprep.subr.mxu0 0.0
        %910 = vmatpush1.msra.mxu0 0.0
        %911 = vmatprep.subr.mxu0 0.0
        %912 = vmatpush1.msra.mxu0 0.0
        %913 = vmatprep.subr.mxu0 0.0
        %914 = vmatpush1.msra.mxu0 0.0
        %915 = vmatprep.subr.mxu0 0.0
        %916 = vmatpush1.msra.mxu0 0.0
        %917 = vmatprep.subr.mxu0 0.0
        %918 = vmatpush1.msra.mxu0 0.0
        %919 = vmatprep.subr.mxu0 0.0
        %920 = vmatpush1.msra.mxu0 0.0
        %921 = vmatprep.subr.mxu0 0.0
        %922 = vmatpush1.msra.mxu0 0.0
        %923 = vmatprep.subr.mxu0 0.0
        %924 = vmatpush1.msra.mxu0 0.0
        %925 = vmatprep.subr.mxu0 0.0
        %926 = vmatpush1.msra.mxu0 0.0
        %927 = vmatprep.subr.mxu0 0.0
        %928 = vmatpush1.msra.mxu0 0.0
        %929 = vmatprep.subr.mxu0 0.0
        %930 = vmatpush1.msra.mxu0 0.0
        %931 = vmatprep.subr.mxu0 0.0
        %932 = vmatpush1.msra.mxu0 0.0
        %933 = vmatprep.subr.mxu0 0.0
        %934 = vmatpush1.msra.mxu0 0.0
        %935 = vmatprep.mubr.f32.mxu0 0.0
        %936 = vmatmul.mubr.f32.gmra.mrb[0].mxu0 %v449
        %v937 = vpop.f32.mrb[0].mxu0
        %v938 = vadd.f32 0.0, %v937
        %v939 = vpop.f32.mrb[0].mxu0
        %940 = vmatprep.mubr.f32.mxu0 0.0
        %941 = vmatmul.mubr.f32.gmra.mrb[0].mxu0 %v451
        %v942 = vpop.f32.mrb[0].mxu0
        %v943 = vadd.f32 0.0, %v942
        %v944 = vpop.f32.mrb[0].mxu0
        %945 = vmatprep.mubr.f32.mxu0 0.0
        %946 = vmatmul.mubr.f32.gmra.mrb[0].mxu0 %v453
        %v947 = vpop.f32.mrb[0].mxu0
        %v948 = vadd.f32 0.0, %v947
        %v949 = vpop.f32.mrb[0].mxu0
        %950 = vmatprep.mubr.f32.mxu0 0.0
        %951 = vmatmul.mubr.f32.gmra.mrb[0].mxu0 %v455
        %v952 = vpop.f32.mrb[0].mxu0
        %v953 = vadd.f32 0.0, %v952
        %v954 = vpop.f32.mrb[0].mxu0
        %955 = vmatprep.mubr.f32.mxu0 0.0
        %956 = vmatmul.mubr.f32.gmra.mrb[0].mxu0 %v457
        %v957 = vpop.f32.mrb[0].mxu0
        %v958 = vadd.f32 0.0, %v957
        %v959 = vpop.f32.mrb[0].mxu0
        %960 = vmatprep.mubr.f32.mxu0 0.0
        %961 = vmatmul.mubr.f32.gmra.mrb[0].mxu0 %v459
        %v962 = vpop.f32.mrb[0].mxu0
        %v963 = vadd.f32 0.0, %v962
        %v964 = vpop.f32.mrb[0].mxu0
        %965 = vmatprep.mubr.f32.mxu0 0.0
        %966 = vmatmul.mubr.f32.gmra.mrb[0].mxu0 %v461
        %v967 = vpop.f32.mrb[0].mxu0
        %v968 = vadd.f32 0.0, %v967
        %v969 = vpop.f32.mrb[0].mxu0
        %970 = vmatprep.mubr.f32.mxu0 0.0
        %971 = vmatmul.mubr.f32.gmra.mrb[0].mxu0 %v463
        %v972 = vpop.f32.mrb[0].mxu0
        %v973 = vadd.f32 0.0, %v972
        %v974 = vpop.f32.mrb[0].mxu0
        %975 = vmatprep.mubr.f32.mxu0 0.0
        %976 = vmatmul.mubr.f32.gmra.mrb[0].mxu0 %v465
        %v977 = vpop.f32.mrb[0].mxu0
        %v978 = vadd.f32 0.0, %v977
        %v979 = vpop.f32.mrb[0].mxu0
        %980 = vmatprep.mubr.f32.mxu0 0.0
        %981 = vmatmul.mubr.f32.gmra.mrb[0].mxu0 %v467
        %v982 = vpop.f32.mrb[0].mxu0
        %v983 = vadd.f32 0.0, %v982
        %v984 = vpop.f32.mrb[0].mxu0
        %985 = vmatprep.mubr.f32.mxu0 0.0
        %986 = vmatmul.mubr.f32.gmra.mrb[0].mxu0 %v469
        %v987 = vpop.f32.mrb[0].mxu0
        %v988 = vadd.f32 0.0, %v987
        %v989 = vpop.f32.mrb[0].mxu0
        %990 = vmatprep.mubr.f32.mxu0 0.0
        %991 = vmatmul.mubr.f32.gmra.mrb[0].mxu0 %v471
        %v992 = vpop.f32.mrb[0].mxu0
        %v993 = vadd.f32 0.0, %v992
        %v994 = vpop.f32.mrb[0].mxu0
        %995 = vmatprep.mubr.f32.mxu0 0.0
        %996 = vmatmul.mubr.f32.gmra.mrb[0].mxu0 %v473
        %v997 = vpop.f32.mrb[0].mxu0
        %v998 = vadd.f32 0.0, %v997
        %v999 = vpop.f32.mrb[0].mxu0
        %1000 = vmatprep.mubr.f32.mxu0 0.0
        %1001 = vmatmul.mubr.f32.gmra.mrb[0].mxu0 %v475
        %v1002 = vpop.f32.mrb[0].mxu0
        %v1003 = vadd.f32 0.0, %v1002
        %v1004 = vpop.f32.mrb[0].mxu0
        %1005 = vmatprep.mubr.f32.mxu0 0.0
        %1006 = vmatmul.mubr.f32.gmra.mrb[0].mxu0 %v863
        %v1007 = vpop.f32.mrb[0].mxu0
        %v1008 = vadd.f32 0.0, %v1007
        %v1009 = vpop.f32.mrb[0].mxu0
        %1010 = vmatprep.mubr.f32.mxu0 0.0
        %1011 = vmatmul.mubr.f32.gmra.mrb[0].mxu0 %v866
        %v1012 = vpop.f32.mrb[0].mxu0
        %v1013 = vadd.f32 0.0, %v1012
        %v1014 = vpop.f32.mrb[0].mxu0
        %1015 = vdwg.mxu0
        %v1016 = vadd.f32 %v846, %v938
        %v1017 = vadd.f32 %v847, %v943
        %v1018 = vadd.f32 %v848, %v948
        %v1019 = vadd.f32 %v849, %v953
        %v1020 = vadd.f32 %v850, %v958
        %v1021 = vadd.f32 %v851, %v963
        %v1022 = vadd.f32 %v852, %v968
        %v1023 = vadd.f32 %v853, %v973
        %v1024 = vadd.f32 %v854, %v978
        %v1025 = vadd.f32 %v855, %v983
        %v1026 = vadd.f32 %v856, %v988
        %v1027 = vadd.f32 %v857, %v993
        %v1028 = vadd.f32 %v858, %v998
        %v1029 = vadd.f32 %v859, %v1003
        %v1030 = vadd.f32 %v860, %v1008
        %v1031 = vadd.f32 %v861, %v1013
        %v1033 = vrot.slane %v183, 1
        %v1034 = vrot.slane %v184, 1
        %v1035 = vsel %vm222, %v1033, %v1034
        %v1036 = vrot.slane %v185, 1
        %v1037 = vsel %vm222, %v1034, %v1036
        %v1038 = vsel %vm263, %v1035, 0
        %v1040 = vsel %vm263, %v1037, 0
        %v1043 = vsel %vm296, %v193, 0
        %1045 = vmatprep.subr.mxu0 0.0
        %1046 = vmatpush1.msra.mxu0 %v1043
        %1047 = vmatprep.subr.mxu0 0.0
        %1048 = vmatpush1.msra.mxu0 0.0
        %1049 = vmatprep.subr.mxu0 0.0
        %1050 = vmatpush1.msra.mxu0 0.0
        %1051 = vmatprep.subr.mxu0 0.0
        %1052 = vmatpush1.msra.mxu0 0.0
        %1053 = vmatprep.subr.mxu0 0.0
        %1054 = vmatpush1.msra.mxu0 0.0
        %1055 = vmatprep.subr.mxu0 0.0
        %1056 = vmatpush1.msra.mxu0 0.0
        %1057 = vmatprep.subr.mxu0 0.0
        %1058 = vmatpush1.msra.mxu0 0.0
        %1059 = vmatprep.subr.mxu0 0.0
        %1060 = vmatpush1.msra.mxu0 0.0
        %1061 = vmatprep.subr.mxu0 0.0
        %1062 = vmatpush1.msra.mxu0 0.0
        %1063 = vmatprep.subr.mxu0 0.0
        %1064 = vmatpush1.msra.mxu0 0.0
        %1065 = vmatprep.subr.mxu0 0.0
        %1066 = vmatpush1.msra.mxu0 0.0
        %1067 = vmatprep.subr.mxu0 0.0
        %1068 = vmatpush1.msra.mxu0 0.0
        %1069 = vmatprep.subr.mxu0 0.0
        %1070 = vmatpush1.msra.mxu0 0.0
        %1071 = vmatprep.subr.mxu0 0.0
        %1072 = vmatpush1.msra.mxu0 0.0
        %1073 = vmatprep.subr.mxu0 0.0
        %1074 = vmatpush1.msra.mxu0 0.0
        %1075 = vmatprep.subr.mxu0 0.0
        %1076 = vmatpush1.msra.mxu0 0.0
        %1077 = vmatprep.subr.mxu0 0.0
        %1078 = vmatpush1.msra.mxu0 0.0
        %1079 = vmatprep.subr.mxu0 0.0
        %1080 = vmatpush1.msra.mxu0 0.0
        %1081 = vmatprep.subr.mxu0 0.0
        %1082 = vmatpush1.msra.mxu0 0.0
        %1083 = vmatprep.subr.mxu0 0.0
        %1084 = vmatpush1.msra.mxu0 0.0
        %1085 = vmatprep.subr.mxu0 0.0
        %1086 = vmatpush1.msra.mxu0 0.0
        %1087 = vmatprep.subr.mxu0 0.0
        %1088 = vmatpush1.msra.mxu0 0.0
        %1089 = vmatprep.subr.mxu0 0.0
        %1090 = vmatpush1.msra.mxu0 0.0
        %1091 = vmatprep.subr.mxu0 0.0
        %1092 = vmatpush1.msra.mxu0 0.0
        %1093 = vmatprep.subr.mxu0 0.0
        %1094 = vmatpush1.msra.mxu0 0.0
        %1095 = vmatprep.subr.mxu0 0.0
        %1096 = vmatpush1.msra.mxu0 0.0
        %1097 = vmatprep.subr.mxu0 0.0
        %1098 = vmatpush1.msra.mxu0 0.0
        %1099 = vmatprep.subr.mxu0 0.0
        %1100 = vmatpush1.msra.mxu0 0.0
        %1101 = vmatprep.subr.mxu0 0.0
        %1102 = vmatpush1.msra.mxu0 0.0
        %1103 = vmatprep.subr.mxu0 0.0
        %1104 = vmatpush1.msra.mxu0 0.0
        %1105 = vmatprep.subr.mxu0 0.0
        %1106 = vmatpush1.msra.mxu0 0.0
        %1107 = vmatprep.subr.mxu0 0.0
        %1108 = vmatpush1.msra.mxu0 0.0
        %1109 = vmatprep.mubr.f32.mxu0 0.0
        %1110 = vmatmul.mubr.f32.gmra.mrb[0].mxu0 %v268
        %v1111 = vpop.f32.mrb[0].mxu0
        %v1112 = vadd.f32 0.0, %v1111
        %v1113 = vpop.f32.mrb[0].mxu0
        %1114 = vmatprep.mubr.f32.mxu0 0.0
        %1115 = vmatmul.mubr.f32.gmra.mrb[0].mxu0 %v270
        %v1116 = vpop.f32.mrb[0].mxu0
        %v1117 = vadd.f32 0.0, %v1116
        %v1118 = vpop.f32.mrb[0].mxu0
        %1119 = vmatprep.mubr.f32.mxu0 0.0
        %1120 = vmatmul.mubr.f32.gmra.mrb[0].mxu0 %v272
        %v1121 = vpop.f32.mrb[0].mxu0
        %v1122 = vadd.f32 0.0, %v1121
        %v1123 = vpop.f32.mrb[0].mxu0
        %1124 = vmatprep.mubr.f32.mxu0 0.0
        %1125 = vmatmul.mubr.f32.gmra.mrb[0].mxu0 %v274
        %v1126 = vpop.f32.mrb[0].mxu0
        %v1127 = vadd.f32 0.0, %v1126
        %v1128 = vpop.f32.mrb[0].mxu0
        %1129 = vmatprep.mubr.f32.mxu0 0.0
        %1130 = vmatmul.mubr.f32.gmra.mrb[0].mxu0 %v276
        %v1131 = vpop.f32.mrb[0].mxu0
        %v1132 = vadd.f32 0.0, %v1131
        %v1133 = vpop.f32.mrb[0].mxu0
        %1134 = vmatprep.mubr.f32.mxu0 0.0
        %1135 = vmatmul.mubr.f32.gmra.mrb[0].mxu0 %v278
        %v1136 = vpop.f32.mrb[0].mxu0
        %v1137 = vadd.f32 0.0, %v1136
        %v1138 = vpop.f32.mrb[0].mxu0
        %1139 = vmatprep.mubr.f32.mxu0 0.0
        %1140 = vmatmul.mubr.f32.gmra.mrb[0].mxu0 %v280
        %v1141 = vpop.f32.mrb[0].mxu0
        %v1142 = vadd.f32 0.0, %v1141
        %v1143 = vpop.f32.mrb[0].mxu0
        %1144 = vmatprep.mubr.f32.mxu0 0.0
        %1145 = vmatmul.mubr.f32.gmra.mrb[0].mxu0 %v282
        %v1146 = vpop.f32.mrb[0].mxu0
        %v1147 = vadd.f32 0.0, %v1146
        %v1148 = vpop.f32.mrb[0].mxu0
        %1149 = vmatprep.mubr.f32.mxu0 0.0
        %1150 = vmatmul.mubr.f32.gmra.mrb[0].mxu0 %v284
        %v1151 = vpop.f32.mrb[0].mxu0
        %v1152 = vadd.f32 0.0, %v1151
        %v1153 = vpop.f32.mrb[0].mxu0
        %1154 = vmatprep.mubr.f32.mxu0 0.0
        %1155 = vmatmul.mubr.f32.gmra.mrb[0].mxu0 %v286
        %v1156 = vpop.f32.mrb[0].mxu0
        %v1157 = vadd.f32 0.0, %v1156
        %v1158 = vpop.f32.mrb[0].mxu0
        %1159 = vmatprep.mubr.f32.mxu0 0.0
        %1160 = vmatmul.mubr.f32.gmra.mrb[0].mxu0 %v288
        %v1161 = vpop.f32.mrb[0].mxu0
        %v1162 = vadd.f32 0.0, %v1161
        %v1163 = vpop.f32.mrb[0].mxu0
        %1164 = vmatprep.mubr.f32.mxu0 0.0
        %1165 = vmatmul.mubr.f32.gmra.mrb[0].mxu0 %v290
        %v1166 = vpop.f32.mrb[0].mxu0
        %v1167 = vadd.f32 0.0, %v1166
        %v1168 = vpop.f32.mrb[0].mxu0
        %1169 = vmatprep.mubr.f32.mxu0 0.0
        %1170 = vmatmul.mubr.f32.gmra.mrb[0].mxu0 %v292
        %v1171 = vpop.f32.mrb[0].mxu0
        %v1172 = vadd.f32 0.0, %v1171
        %v1173 = vpop.f32.mrb[0].mxu0
        %1174 = vmatprep.mubr.f32.mxu0 0.0
        %1175 = vmatmul.mubr.f32.gmra.mrb[0].mxu0 %v294
        %v1176 = vpop.f32.mrb[0].mxu0
        %v1177 = vadd.f32 0.0, %v1176
        %v1178 = vpop.f32.mrb[0].mxu0
        %1179 = vmatprep.mubr.f32.mxu0 0.0
        %1180 = vmatmul.mubr.f32.gmra.mrb[0].mxu0 %v1038
        %v1181 = vpop.f32.mrb[0].mxu0
        %v1182 = vadd.f32 0.0, %v1181
        %v1183 = vpop.f32.mrb[0].mxu0
        %1184 = vmatprep.mubr.f32.mxu0 0.0
        %1185 = vmatmul.mubr.f32.gmra.mrb[0].mxu0 %v1040
        %v1186 = vpop.f32.mrb[0].mxu0
        %v1187 = vadd.f32 0.0, %v1186
        %v1188 = vpop.f32.mrb[0].mxu0
        %1189 = vdwg.mxu0
        %v1190 = vadd.f32 %v1016, %v1112
        %v1191 = vadd.f32 %v1017, %v1117
        %v1192 = vadd.f32 %v1018, %v1122
        %v1193 = vadd.f32 %v1019, %v1127
        %v1194 = vadd.f32 %v1020, %v1132
        %v1195 = vadd.f32 %v1021, %v1137
        %v1196 = vadd.f32 %v1022, %v1142
        %v1197 = vadd.f32 %v1023, %v1147
        %v1198 = vadd.f32 %v1024, %v1152
        %v1199 = vadd.f32 %v1025, %v1157
        %v1200 = vadd.f32 %v1026, %v1162
        %v1201 = vadd.f32 %v1027, %v1167
        %v1202 = vadd.f32 %v1028, %v1172
        %v1203 = vadd.f32 %v1029, %v1177
        %v1204 = vadd.f32 %v1030, %v1182
        %v1205 = vadd.f32 %v1031, %v1187
        %v1206 = vrot.slane %v183, 2
        %v1207 = vrot.slane %v184, 2
        %v1208 = vsel %vm625, %v1206, %v1207
        %v1209 = vrot.slane %v185, 2
        %v1210 = vsel %vm625, %v1207, %v1209
        %v1211 = vsel %vm263, %v1208, 0
        %v1213 = vsel %vm263, %v1210, 0
        %v1216 = vsel %vm296, %v194, 0
        %1218 = vmatprep.subr.mxu0 0.0
        %1219 = vmatpush1.msra.mxu0 %v1216
        %1220 = vmatprep.subr.mxu0 0.0
        %1221 = vmatpush1.msra.mxu0 0.0
        %1222 = vmatprep.subr.mxu0 0.0
        %1223 = vmatpush1.msra.mxu0 0.0
        %1224 = vmatprep.subr.mxu0 0.0
        %1225 = vmatpush1.msra.mxu0 0.0
        %1226 = vmatprep.subr.mxu0 0.0
        %1227 = vmatpush1.msra.mxu0 0.0
        %1228 = vmatprep.subr.mxu0 0.0
        %1229 = vmatpush1.msra.mxu0 0.0
        %1230 = vmatprep.subr.mxu0 0.0
        %1231 = vmatpush1.msra.mxu0 0.0
        %1232 = vmatprep.subr.mxu0 0.0
        %1233 = vmatpush1.msra.mxu0 0.0
        %1234 = vmatprep.subr.mxu0 0.0
        %1235 = vmatpush1.msra.mxu0 0.0
        %1236 = vmatprep.subr.mxu0 0.0
        %1237 = vmatpush1.msra.mxu0 0.0
        %1238 = vmatprep.subr.mxu0 0.0
        %1239 = vmatpush1.msra.mxu0 0.0
        %1240 = vmatprep.subr.mxu0 0.0
        %1241 = vmatpush1.msra.mxu0 0.0
        %1242 = vmatprep.subr.mxu0 0.0
        %1243 = vmatpush1.msra.mxu0 0.0
        %1244 = vmatprep.subr.mxu0 0.0
        %1245 = vmatpush1.msra.mxu0 0.0
        %1246 = vmatprep.subr.mxu0 0.0
        %1247 = vmatpush1.msra.mxu0 0.0
        %1248 = vmatprep.subr.mxu0 0.0
        %1249 = vmatpush1.msra.mxu0 0.0
        %1250 = vmatprep.subr.mxu0 0.0
        %1251 = vmatpush1.msra.mxu0 0.0
        %1252 = vmatprep.subr.mxu0 0.0
        %1253 = vmatpush1.msra.mxu0 0.0
        %1254 = vmatprep.subr.mxu0 0.0
        %1255 = vmatpush1.msra.mxu0 0.0
        %1256 = vmatprep.subr.mxu0 0.0
        %1257 = vmatpush1.msra.mxu0 0.0
        %1258 = vmatprep.subr.mxu0 0.0
        %1259 = vmatpush1.msra.mxu0 0.0
        %1260 = vmatprep.subr.mxu0 0.0
        %1261 = vmatpush1.msra.mxu0 0.0
        %1262 = vmatprep.subr.mxu0 0.0
        %1263 = vmatpush1.msra.mxu0 0.0
        %1264 = vmatprep.subr.mxu0 0.0
        %1265 = vmatpush1.msra.mxu0 0.0
        %1266 = vmatprep.subr.mxu0 0.0
        %1267 = vmatpush1.msra.mxu0 0.0
        %1268 = vmatprep.subr.mxu0 0.0
        %1269 = vmatpush1.msra.mxu0 0.0
        %1270 = vmatprep.subr.mxu0 0.0
        %1271 = vmatpush1.msra.mxu0 0.0
        %1272 = vmatprep.subr.mxu0 0.0
        %1273 = vmatpush1.msra.mxu0 0.0
        %1274 = vmatprep.subr.mxu0 0.0
        %1275 = vmatpush1.msra.mxu0 0.0
        %1276 = vmatprep.subr.mxu0 0.0
        %1277 = vmatpush1.msra.mxu0 0.0
        %1278 = vmatprep.subr.mxu0 0.0
        %1279 = vmatpush1.msra.mxu0 0.0
        %1280 = vmatprep.subr.mxu0 0.0
        %1281 = vmatpush1.msra.mxu0 0.0
        %1282 = vmatprep.mubr.f32.mxu0 0.0
        %1283 = vmatmul.mubr.f32.gmra.mrb[0].mxu0 %v670
        %v1284 = vpop.f32.mrb[0].mxu0
        %v1285 = vadd.f32 0.0, %v1284
        %v1286 = vpop.f32.mrb[0].mxu0
        %1287 = vmatprep.mubr.f32.mxu0 0.0
        %1288 = vmatmul.mubr.f32.gmra.mrb[0].mxu0 %v672
        %v1289 = vpop.f32.mrb[0].mxu0
        %v1290 = vadd.f32 0.0, %v1289
        %v1291 = vpop.f32.mrb[0].mxu0
        %1292 = vmatprep.mubr.f32.mxu0 0.0
        %1293 = vmatmul.mubr.f32.gmra.mrb[0].mxu0 %v674
        %v1294 = vpop.f32.mrb[0].mxu0
        %v1295 = vadd.f32 0.0, %v1294
        %v1296 = vpop.f32.mrb[0].mxu0
        %1297 = vmatprep.mubr.f32.mxu0 0.0
        %1298 = vmatmul.mubr.f32.gmra.mrb[0].mxu0 %v676
        %v1299 = vpop.f32.mrb[0].mxu0
        %v1300 = vadd.f32 0.0, %v1299
        %v1301 = vpop.f32.mrb[0].mxu0
        %1302 = vmatprep.mubr.f32.mxu0 0.0
        %1303 = vmatmul.mubr.f32.gmra.mrb[0].mxu0 %v678
        %v1304 = vpop.f32.mrb[0].mxu0
        %v1305 = vadd.f32 0.0, %v1304
        %v1306 = vpop.f32.mrb[0].mxu0
        %1307 = vmatprep.mubr.f32.mxu0 0.0
        %1308 = vmatmul.mubr.f32.gmra.mrb[0].mxu0 %v680
        %v1309 = vpop.f32.mrb[0].mxu0
        %v1310 = vadd.f32 0.0, %v1309
        %v1311 = vpop.f32.mrb[0].mxu0
        %1312 = vmatprep.mubr.f32.mxu0 0.0
        %1313 = vmatmul.mubr.f32.gmra.mrb[0].mxu0 %v682
        %v1314 = vpop.f32.mrb[0].mxu0
        %v1315 = vadd.f32 0.0, %v1314
        %v1316 = vpop.f32.mrb[0].mxu0
        %1317 = vmatprep.mubr.f32.mxu0 0.0
        %1318 = vmatmul.mubr.f32.gmra.mrb[0].mxu0 %v684
        %v1319 = vpop.f32.mrb[0].mxu0
        %v1320 = vadd.f32 0.0, %v1319
        %v1321 = vpop.f32.mrb[0].mxu0
        %1322 = vmatprep.mubr.f32.mxu0 0.0
        %1323 = vmatmul.mubr.f32.gmra.mrb[0].mxu0 %v686
        %v1324 = vpop.f32.mrb[0].mxu0
        %v1325 = vadd.f32 0.0, %v1324
        %v1326 = vpop.f32.mrb[0].mxu0
        %1327 = vmatprep.mubr.f32.mxu0 0.0
        %1328 = vmatmul.mubr.f32.gmra.mrb[0].mxu0 %v688
        %v1329 = vpop.f32.mrb[0].mxu0
        %v1330 = vadd.f32 0.0, %v1329
        %v1331 = vpop.f32.mrb[0].mxu0
        %1332 = vmatprep.mubr.f32.mxu0 0.0
        %1333 = vmatmul.mubr.f32.gmra.mrb[0].mxu0 %v690
        %v1334 = vpop.f32.mrb[0].mxu0
        %v1335 = vadd.f32 0.0, %v1334
        %v1336 = vpop.f32.mrb[0].mxu0
        %1337 = vmatprep.mubr.f32.mxu0 0.0
        %1338 = vmatmul.mubr.f32.gmra.mrb[0].mxu0 %v692
        %v1339 = vpop.f32.mrb[0].mxu0
        %v1340 = vadd.f32 0.0, %v1339
        %v1341 = vpop.f32.mrb[0].mxu0
        %1342 = vmatprep.mubr.f32.mxu0 0.0
        %1343 = vmatmul.mubr.f32.gmra.mrb[0].mxu0 %v694
        %v1344 = vpop.f32.mrb[0].mxu0
        %v1345 = vadd.f32 0.0, %v1344
        %v1346 = vpop.f32.mrb[0].mxu0
        %1347 = vmatprep.mubr.f32.mxu0 0.0
        %1348 = vmatmul.mubr.f32.gmra.mrb[0].mxu0 %v696
        %v1349 = vpop.f32.mrb[0].mxu0
        %v1350 = vadd.f32 0.0, %v1349
        %v1351 = vpop.f32.mrb[0].mxu0
        %1352 = vmatprep.mubr.f32.mxu0 0.0
        %1353 = vmatmul.mubr.f32.gmra.mrb[0].mxu0 %v1211
        %v1354 = vpop.f32.mrb[0].mxu0
        %v1355 = vadd.f32 0.0, %v1354
        %v1356 = vpop.f32.mrb[0].mxu0
        %1357 = vmatprep.mubr.f32.mxu0 0.0
        %1358 = vmatmul.mubr.f32.gmra.mrb[0].mxu0 %v1213
        %v1359 = vpop.f32.mrb[0].mxu0
        %v1360 = vadd.f32 0.0, %v1359
        %v1361 = vpop.f32.mrb[0].mxu0
        %1362 = vdwg.mxu0
        %v1363 = vadd.f32 %v1190, %v1285
        %v1364 = vadd.f32 %v1191, %v1290
        %v1365 = vadd.f32 %v1192, %v1295
        %v1366 = vadd.f32 %v1193, %v1300
        %v1367 = vadd.f32 %v1194, %v1305
        %v1368 = vadd.f32 %v1195, %v1310
        %v1369 = vadd.f32 %v1196, %v1315
        %v1370 = vadd.f32 %v1197, %v1320
        %v1371 = vadd.f32 %v1198, %v1325
        %v1372 = vadd.f32 %v1199, %v1330
        %v1373 = vadd.f32 %v1200, %v1335
        %v1374 = vadd.f32 %v1201, %v1340
        %v1375 = vadd.f32 %v1202, %v1345
        %v1376 = vadd.f32 %v1203, %v1350
        %v1377 = vadd.f32 %v1204, %v1355
        %v1378 = vadd.f32 %v1205, %v1360
        %v1380 = vsel %vm263, %v186, 0
        %v1383 = vsel %vm263, %v187, 0
        %v1386 = vsel %vm296, %v195, 0
        %1388 = vmatprep.subr.mxu0 0.0
        %1389 = vmatpush1.msra.mxu0 %v1386
        %1390 = vmatprep.subr.mxu0 0.0
        %1391 = vmatpush1.msra.mxu0 0.0
        %1392 = vmatprep.subr.mxu0 0.0
        %1393 = vmatpush1.msra.mxu0 0.0
        %1394 = vmatprep.subr.mxu0 0.0
        %1395 = vmatpush1.msra.mxu0 0.0
        %1396 = vmatprep.subr.mxu0 0.0
        %1397 = vmatpush1.msra.mxu0 0.0
        %1398 = vmatprep.subr.mxu0 0.0
        %1399 = vmatpush1.msra.mxu0 0.0
        %1400 = vmatprep.subr.mxu0 0.0
        %1401 = vmatpush1.msra.mxu0 0.0
        %1402 = vmatprep.subr.mxu0 0.0
        %1403 = vmatpush1.msra.mxu0 0.0
        %1404 = vmatprep.subr.mxu0 0.0
        %1405 = vmatpush1.msra.mxu0 0.0
        %1406 = vmatprep.subr.mxu0 0.0
        %1407 = vmatpush1.msra.mxu0 0.0
        %1408 = vmatprep.subr.mxu0 0.0
        %1409 = vmatpush1.msra.mxu0 0.0
        %1410 = vmatprep.subr.mxu0 0.0
        %1411 = vmatpush1.msra.mxu0 0.0
        %1412 = vmatprep.subr.mxu0 0.0
        %1413 = vmatpush1.msra.mxu0 0.0
        %1414 = vmatprep.subr.mxu0 0.0
        %1415 = vmatpush1.msra.mxu0 0.0
        %1416 = vmatprep.subr.mxu0 0.0
        %1417 = vmatpush1.msra.mxu0 0.0
        %1418 = vmatprep.subr.mxu0 0.0
        %1419 = vmatpush1.msra.mxu0 0.0
        %1420 = vmatprep.subr.mxu0 0.0
        %1421 = vmatpush1.msra.mxu0 0.0
        %1422 = vmatprep.subr.mxu0 0.0
        %1423 = vmatpush1.msra.mxu0 0.0
        %1424 = vmatprep.subr.mxu0 0.0
        %1425 = vmatpush1.msra.mxu0 0.0
        %1426 = vmatprep.subr.mxu0 0.0
        %1427 = vmatpush1.msra.mxu0 0.0
        %1428 = vmatprep.subr.mxu0 0.0
        %1429 = vmatpush1.msra.mxu0 0.0
        %1430 = vmatprep.subr.mxu0 0.0
        %1431 = vmatpush1.msra.mxu0 0.0
        %1432 = vmatprep.subr.mxu0 0.0
        %1433 = vmatpush1.msra.mxu0 0.0
        %1434 = vmatprep.subr.mxu0 0.0
        %1435 = vmatpush1.msra.mxu0 0.0
        %1436 = vmatprep.subr.mxu0 0.0
        %1437 = vmatpush1.msra.mxu0 0.0
        %1438 = vmatprep.subr.mxu0 0.0
        %1439 = vmatpush1.msra.mxu0 0.0
        %1440 = vmatprep.subr.mxu0 0.0
        %1441 = vmatpush1.msra.mxu0 0.0
        %1442 = vmatprep.subr.mxu0 0.0
        %1443 = vmatpush1.msra.mxu0 0.0
        %1444 = vmatprep.subr.mxu0 0.0
        %1445 = vmatpush1.msra.mxu0 0.0
        %1446 = vmatprep.subr.mxu0 0.0
        %1447 = vmatpush1.msra.mxu0 0.0
        %1448 = vmatprep.subr.mxu0 0.0
        %1449 = vmatpush1.msra.mxu0 0.0
        %1450 = vmatprep.subr.mxu0 0.0
        %1451 = vmatpush1.msra.mxu0 0.0
        %1452 = vmatprep.mubr.f32.mxu0 0.0
        %1453 = vmatmul.mubr.f32.gmra.mrb[0].mxu0 %v453
        %v1454 = vpop.f32.mrb[0].mxu0
        %v1455 = vadd.f32 0.0, %v1454
        %v1456 = vpop.f32.mrb[0].mxu0
        %1457 = vmatprep.mubr.f32.mxu0 0.0
        %1458 = vmatmul.mubr.f32.gmra.mrb[0].mxu0 %v455
        %v1459 = vpop.f32.mrb[0].mxu0
        %v1460 = vadd.f32 0.0, %v1459
        %v1461 = vpop.f32.mrb[0].mxu0
        %1462 = vmatprep.mubr.f32.mxu0 0.0
        %1463 = vmatmul.mubr.f32.gmra.mrb[0].mxu0 %v457
        %v1464 = vpop.f32.mrb[0].mxu0
        %v1465 = vadd.f32 0.0, %v1464
        %v1466 = vpop.f32.mrb[0].mxu0
        %1467 = vmatprep.mubr.f32.mxu0 0.0
        %1468 = vmatmul.mubr.f32.gmra.mrb[0].mxu0 %v459
        %v1469 = vpop.f32.mrb[0].mxu0
        %v1470 = vadd.f32 0.0, %v1469
        %v1471 = vpop.f32.mrb[0].mxu0
        %1472 = vmatprep.mubr.f32.mxu0 0.0
        %1473 = vmatmul.mubr.f32.gmra.mrb[0].mxu0 %v461
        %v1474 = vpop.f32.mrb[0].mxu0
        %v1475 = vadd.f32 0.0, %v1474
        %v1476 = vpop.f32.mrb[0].mxu0
        %1477 = vmatprep.mubr.f32.mxu0 0.0
        %1478 = vmatmul.mubr.f32.gmra.mrb[0].mxu0 %v463
        %v1479 = vpop.f32.mrb[0].mxu0
        %v1480 = vadd.f32 0.0, %v1479
        %v1481 = vpop.f32.mrb[0].mxu0
        %1482 = vmatprep.mubr.f32.mxu0 0.0
        %1483 = vmatmul.mubr.f32.gmra.mrb[0].mxu0 %v465
        %v1484 = vpop.f32.mrb[0].mxu0
        %v1485 = vadd.f32 0.0, %v1484
        %v1486 = vpop.f32.mrb[0].mxu0
        %1487 = vmatprep.mubr.f32.mxu0 0.0
        %1488 = vmatmul.mubr.f32.gmra.mrb[0].mxu0 %v467
        %v1489 = vpop.f32.mrb[0].mxu0
        %v1490 = vadd.f32 0.0, %v1489
        %v1491 = vpop.f32.mrb[0].mxu0
        %1492 = vmatprep.mubr.f32.mxu0 0.0
        %1493 = vmatmul.mubr.f32.gmra.mrb[0].mxu0 %v469
        %v1494 = vpop.f32.mrb[0].mxu0
        %v1495 = vadd.f32 0.0, %v1494
        %v1496 = vpop.f32.mrb[0].mxu0
        %1497 = vmatprep.mubr.f32.mxu0 0.0
        %1498 = vmatmul.mubr.f32.gmra.mrb[0].mxu0 %v471
        %v1499 = vpop.f32.mrb[0].mxu0
        %v1500 = vadd.f32 0.0, %v1499
        %v1501 = vpop.f32.mrb[0].mxu0
        %1502 = vmatprep.mubr.f32.mxu0 0.0
        %1503 = vmatmul.mubr.f32.gmra.mrb[0].mxu0 %v473
        %v1504 = vpop.f32.mrb[0].mxu0
        %v1505 = vadd.f32 0.0, %v1504
        %v1506 = vpop.f32.mrb[0].mxu0
        %1507 = vmatprep.mubr.f32.mxu0 0.0
        %1508 = vmatmul.mubr.f32.gmra.mrb[0].mxu0 %v475
        %v1509 = vpop.f32.mrb[0].mxu0
        %v1510 = vadd.f32 0.0, %v1509
        %v1511 = vpop.f32.mrb[0].mxu0
        %1512 = vmatprep.mubr.f32.mxu0 0.0
        %1513 = vmatmul.mubr.f32.gmra.mrb[0].mxu0 %v863
        %v1514 = vpop.f32.mrb[0].mxu0
        %v1515 = vadd.f32 0.0, %v1514
        %v1516 = vpop.f32.mrb[0].mxu0
        %1517 = vmatprep.mubr.f32.mxu0 0.0
        %1518 = vmatmul.mubr.f32.gmra.mrb[0].mxu0 %v866
        %v1519 = vpop.f32.mrb[0].mxu0
        %v1520 = vadd.f32 0.0, %v1519
        %v1521 = vpop.f32.mrb[0].mxu0
        %1522 = vmatprep.mubr.f32.mxu0 0.0
        %1523 = vmatmul.mubr.f32.gmra.mrb[0].mxu0 %v1380
        %v1524 = vpop.f32.mrb[0].mxu0
        %v1525 = vadd.f32 0.0, %v1524
        %v1526 = vpop.f32.mrb[0].mxu0
        %1527 = vmatprep.mubr.f32.mxu0 0.0
        %1528 = vmatmul.mubr.f32.gmra.mrb[0].mxu0 %v1383
        %v1529 = vpop.f32.mrb[0].mxu0
        %v1530 = vadd.f32 0.0, %v1529
        %v1531 = vpop.f32.mrb[0].mxu0
        %1532 = vdwg.mxu0
        %v1533 = vadd.f32 %v1363, %v1455
        %v1534 = vadd.f32 %v1364, %v1460
        %v1535 = vadd.f32 %v1365, %v1465
        %v1536 = vadd.f32 %v1366, %v1470
        %v1537 = vadd.f32 %v1367, %v1475
        %v1538 = vadd.f32 %v1368, %v1480
        %v1539 = vadd.f32 %v1369, %v1485
        %v1540 = vadd.f32 %v1370, %v1490
        %v1541 = vadd.f32 %v1371, %v1495
        %v1542 = vadd.f32 %v1372, %v1500
        %v1543 = vadd.f32 %v1373, %v1505
        %v1544 = vadd.f32 %v1374, %v1510
        %v1545 = vadd.f32 %v1375, %v1515
        %v1546 = vadd.f32 %v1376, %v1520
        %v1547 = vadd.f32 %v1377, %v1525
        %v1548 = vadd.f32 %v1378, %v1530
        %v1550 = vrot.slane %v186, 1
        %v1551 = vrot.slane %v187, 1
        %v1552 = vsel %vm222, %v1550, %v1551
        %v1553 = vrot.slane %v188, 1
        %v1554 = vsel %vm222, %v1551, %v1553
        %v1555 = vsel %vm263, %v1552, 0
        %v1557 = vsel %vm263, %v1554, 0
        %v1560 = vsel %vm296, %v196, 0
        %1562 = vmatprep.subr.mxu0 0.0
        %1563 = vmatpush1.msra.mxu0 %v1560
        %1564 = vmatprep.subr.mxu0 0.0
        %1565 = vmatpush1.msra.mxu0 0.0
        %1566 = vmatprep.subr.mxu0 0.0
        %1567 = vmatpush1.msra.mxu0 0.0
        %1568 = vmatprep.subr.mxu0 0.0
        %1569 = vmatpush1.msra.mxu0 0.0
        %1570 = vmatprep.subr.mxu0 0.0
        %1571 = vmatpush1.msra.mxu0 0.0
        %1572 = vmatprep.subr.mxu0 0.0
        %1573 = vmatpush1.msra.mxu0 0.0
        %1574 = vmatprep.subr.mxu0 0.0
        %1575 = vmatpush1.msra.mxu0 0.0
        %1576 = vmatprep.subr.mxu0 0.0
        %1577 = vmatpush1.msra.mxu0 0.0
        %1578 = vmatprep.subr.mxu0 0.0
        %1579 = vmatpush1.msra.mxu0 0.0
        %1580 = vmatprep.subr.mxu0 0.0
        %1581 = vmatpush1.msra.mxu0 0.0
        %1582 = vmatprep.subr.mxu0 0.0
        %1583 = vmatpush1.msra.mxu0 0.0
        %1584 = vmatprep.subr.mxu0 0.0
        %1585 = vmatpush1.msra.mxu0 0.0
        %1586 = vmatprep.subr.mxu0 0.0
        %1587 = vmatpush1.msra.mxu0 0.0
        %1588 = vmatprep.subr.mxu0 0.0
        %1589 = vmatpush1.msra.mxu0 0.0
        %1590 = vmatprep.subr.mxu0 0.0
        %1591 = vmatpush1.msra.mxu0 0.0
        %1592 = vmatprep.subr.mxu0 0.0
        %1593 = vmatpush1.msra.mxu0 0.0
        %1594 = vmatprep.subr.mxu0 0.0
        %1595 = vmatpush1.msra.mxu0 0.0
        %1596 = vmatprep.subr.mxu0 0.0
        %1597 = vmatpush1.msra.mxu0 0.0
        %1598 = vmatprep.subr.mxu0 0.0
        %1599 = vmatpush1.msra.mxu0 0.0
        %1600 = vmatprep.subr.mxu0 0.0
        %1601 = vmatpush1.msra.mxu0 0.0
        %1602 = vmatprep.subr.mxu0 0.0
        %1603 = vmatpush1.msra.mxu0 0.0
        %1604 = vmatprep.subr.mxu0 0.0
        %1605 = vmatpush1.msra.mxu0 0.0
        %1606 = vmatprep.subr.mxu0 0.0
        %1607 = vmatpush1.msra.mxu0 0.0
        %1608 = vmatprep.subr.mxu0 0.0
        %1609 = vmatpush1.msra.mxu0 0.0
        %1610 = vmatprep.subr.mxu0 0.0
        %1611 = vmatpush1.msra.mxu0 0.0
        %1612 = vmatprep.subr.mxu0 0.0
        %1613 = vmatpush1.msra.mxu0 0.0
        %1614 = vmatprep.subr.mxu0 0.0
        %1615 = vmatpush1.msra.mxu0 0.0
        %1616 = vmatprep.subr.mxu0 0.0
        %1617 = vmatpush1.msra.mxu0 0.0
        %1618 = vmatprep.subr.mxu0 0.0
        %1619 = vmatpush1.msra.mxu0 0.0
        %1620 = vmatprep.subr.mxu0 0.0
        %1621 = vmatpush1.msra.mxu0 0.0
        %1622 = vmatprep.subr.mxu0 0.0
        %1623 = vmatpush1.msra.mxu0 0.0
        %1624 = vmatprep.subr.mxu0 0.0
        %1625 = vmatpush1.msra.mxu0 0.0
        %1626 = vmatprep.mubr.f32.mxu0 0.0
        %1627 = vmatmul.mubr.f32.gmra.mrb[0].mxu0 %v272
        %v1628 = vpop.f32.mrb[0].mxu0
        %v1629 = vadd.f32 0.0, %v1628
        %v1630 = vpop.f32.mrb[0].mxu0
        %1631 = vmatprep.mubr.f32.mxu0 0.0
        %1632 = vmatmul.mubr.f32.gmra.mrb[0].mxu0 %v274
        %v1633 = vpop.f32.mrb[0].mxu0
        %v1634 = vadd.f32 0.0, %v1633
        %v1635 = vpop.f32.mrb[0].mxu0
        %1636 = vmatprep.mubr.f32.mxu0 0.0
        %1637 = vmatmul.mubr.f32.gmra.mrb[0].mxu0 %v276
        %v1638 = vpop.f32.mrb[0].mxu0
        %v1639 = vadd.f32 0.0, %v1638
        %v1640 = vpop.f32.mrb[0].mxu0
        %1641 = vmatprep.mubr.f32.mxu0 0.0
        %1642 = vmatmul.mubr.f32.gmra.mrb[0].mxu0 %v278
        %v1643 = vpop.f32.mrb[0].mxu0
        %v1644 = vadd.f32 0.0, %v1643
        %v1645 = vpop.f32.mrb[0].mxu0
        %1646 = vmatprep.mubr.f32.mxu0 0.0
        %1647 = vmatmul.mubr.f32.gmra.mrb[0].mxu0 %v280
        %v1648 = vpop.f32.mrb[0].mxu0
        %v1649 = vadd.f32 0.0, %v1648
        %v1650 = vpop.f32.mrb[0].mxu0
        %1651 = vmatprep.mubr.f32.mxu0 0.0
        %1652 = vmatmul.mubr.f32.gmra.mrb[0].mxu0 %v282
        %v1653 = vpop.f32.mrb[0].mxu0
        %v1654 = vadd.f32 0.0, %v1653
        %v1655 = vpop.f32.mrb[0].mxu0
        %1656 = vmatprep.mubr.f32.mxu0 0.0
        %1657 = vmatmul.mubr.f32.gmra.mrb[0].mxu0 %v284
        %v1658 = vpop.f32.mrb[0].mxu0
        %v1659 = vadd.f32 0.0, %v1658
        %v1660 = vpop.f32.mrb[0].mxu0
        %1661 = vmatprep.mubr.f32.mxu0 0.0
        %1662 = vmatmul.mubr.f32.gmra.mrb[0].mxu0 %v286
        %v1663 = vpop.f32.mrb[0].mxu0
        %v1664 = vadd.f32 0.0, %v1663
        %v1665 = vpop.f32.mrb[0].mxu0
        %1666 = vmatprep.mubr.f32.mxu0 0.0
        %1667 = vmatmul.mubr.f32.gmra.mrb[0].mxu0 %v288
        %v1668 = vpop.f32.mrb[0].mxu0
        %v1669 = vadd.f32 0.0, %v1668
        %v1670 = vpop.f32.mrb[0].mxu0
        %1671 = vmatprep.mubr.f32.mxu0 0.0
        %1672 = vmatmul.mubr.f32.gmra.mrb[0].mxu0 %v290
        %v1673 = vpop.f32.mrb[0].mxu0
        %v1674 = vadd.f32 0.0, %v1673
        %v1675 = vpop.f32.mrb[0].mxu0
        %1676 = vmatprep.mubr.f32.mxu0 0.0
        %1677 = vmatmul.mubr.f32.gmra.mrb[0].mxu0 %v292
        %v1678 = vpop.f32.mrb[0].mxu0
        %v1679 = vadd.f32 0.0, %v1678
        %v1680 = vpop.f32.mrb[0].mxu0
        %1681 = vmatprep.mubr.f32.mxu0 0.0
        %1682 = vmatmul.mubr.f32.gmra.mrb[0].mxu0 %v294
        %v1683 = vpop.f32.mrb[0].mxu0
        %v1684 = vadd.f32 0.0, %v1683
        %v1685 = vpop.f32.mrb[0].mxu0
        %1686 = vmatprep.mubr.f32.mxu0 0.0
        %1687 = vmatmul.mubr.f32.gmra.mrb[0].mxu0 %v1038
        %v1688 = vpop.f32.mrb[0].mxu0
        %v1689 = vadd.f32 0.0, %v1688
        %v1690 = vpop.f32.mrb[0].mxu0
        %1691 = vmatprep.mubr.f32.mxu0 0.0
        %1692 = vmatmul.mubr.f32.gmra.mrb[0].mxu0 %v1040
        %v1693 = vpop.f32.mrb[0].mxu0
        %v1694 = vadd.f32 0.0, %v1693
        %v1695 = vpop.f32.mrb[0].mxu0
        %1696 = vmatprep.mubr.f32.mxu0 0.0
        %1697 = vmatmul.mubr.f32.gmra.mrb[0].mxu0 %v1555
        %v1698 = vpop.f32.mrb[0].mxu0
        %v1699 = vadd.f32 0.0, %v1698
        %v1700 = vpop.f32.mrb[0].mxu0
        %1701 = vmatprep.mubr.f32.mxu0 0.0
        %1702 = vmatmul.mubr.f32.gmra.mrb[0].mxu0 %v1557
        %v1703 = vpop.f32.mrb[0].mxu0
        %v1704 = vadd.f32 0.0, %v1703
        %v1705 = vpop.f32.mrb[0].mxu0
        %1706 = vdwg.mxu0
        %v1707 = vadd.f32 %v1533, %v1629
        %v1708 = vadd.f32 %v1534, %v1634
        %v1709 = vadd.f32 %v1535, %v1639
        %v1710 = vadd.f32 %v1536, %v1644
        %v1711 = vadd.f32 %v1537, %v1649
        %v1712 = vadd.f32 %v1538, %v1654
        %v1713 = vadd.f32 %v1539, %v1659
        %v1714 = vadd.f32 %v1540, %v1664
        %v1715 = vadd.f32 %v1541, %v1669
        %v1716 = vadd.f32 %v1542, %v1674
        %v1717 = vadd.f32 %v1543, %v1679
        %v1718 = vadd.f32 %v1544, %v1684
        %v1719 = vadd.f32 %v1545, %v1689
        %v1720 = vadd.f32 %v1546, %v1694
        %v1721 = vadd.f32 %v1547, %v1699
        %v1722 = vadd.f32 %v1548, %v1704
        %v1723 = vrot.slane %v186, 2
        %v1724 = vrot.slane %v187, 2
        %v1725 = vsel %vm625, %v1723, %v1724
        %v1726 = vrot.slane %v188, 2
        %v1727 = vsel %vm625, %v1724, %v1726
        %v1728 = vsel %vm263, %v1725, 0
        %v1730 = vsel %vm263, %v1727, 0
        %v1733 = vsel %vm296, %v197, 0
        %1735 = vmatprep.subr.mxu0 0.0
        %1736 = vmatpush1.msra.mxu0 %v1733
        %1737 = vmatprep.subr.mxu0 0.0
        %1738 = vmatpush1.msra.mxu0 0.0
        %1739 = vmatprep.subr.mxu0 0.0
        %1740 = vmatpush1.msra.mxu0 0.0
        %1741 = vmatprep.subr.mxu0 0.0
        %1742 = vmatpush1.msra.mxu0 0.0
        %1743 = vmatprep.subr.mxu0 0.0
        %1744 = vmatpush1.msra.mxu0 0.0
        %1745 = vmatprep.subr.mxu0 0.0
        %1746 = vmatpush1.msra.mxu0 0.0
        %1747 = vmatprep.subr.mxu0 0.0
        %1748 = vmatpush1.msra.mxu0 0.0
        %1749 = vmatprep.subr.mxu0 0.0
        %1750 = vmatpush1.msra.mxu0 0.0
        %1751 = vmatprep.subr.mxu0 0.0
        %1752 = vmatpush1.msra.mxu0 0.0
        %1753 = vmatprep.subr.mxu0 0.0
        %1754 = vmatpush1.msra.mxu0 0.0
        %1755 = vmatprep.subr.mxu0 0.0
        %1756 = vmatpush1.msra.mxu0 0.0
        %1757 = vmatprep.subr.mxu0 0.0
        %1758 = vmatpush1.msra.mxu0 0.0
        %1759 = vmatprep.subr.mxu0 0.0
        %1760 = vmatpush1.msra.mxu0 0.0
        %1761 = vmatprep.subr.mxu0 0.0
        %1762 = vmatpush1.msra.mxu0 0.0
        %1763 = vmatprep.subr.mxu0 0.0
        %1764 = vmatpush1.msra.mxu0 0.0
        %1765 = vmatprep.subr.mxu0 0.0
        %1766 = vmatpush1.msra.mxu0 0.0
        %1767 = vmatprep.subr.mxu0 0.0
        %1768 = vmatpush1.msra.mxu0 0.0
        %1769 = vmatprep.subr.mxu0 0.0
        %1770 = vmatpush1.msra.mxu0 0.0
        %1771 = vmatprep.subr.mxu0 0.0
        %1772 = vmatpush1.msra.mxu0 0.0
        %1773 = vmatprep.subr.mxu0 0.0
        %1774 = vmatpush1.msra.mxu0 0.0
        %1775 = vmatprep.subr.mxu0 0.0
        %1776 = vmatpush1.msra.mxu0 0.0
        %1777 = vmatprep.subr.mxu0 0.0
        %1778 = vmatpush1.msra.mxu0 0.0
        %1779 = vmatprep.subr.mxu0 0.0
        %1780 = vmatpush1.msra.mxu0 0.0
        %1781 = vmatprep.subr.mxu0 0.0
        %1782 = vmatpush1.msra.mxu0 0.0
        %1783 = vmatprep.subr.mxu0 0.0
        %1784 = vmatpush1.msra.mxu0 0.0
        %1785 = vmatprep.subr.mxu0 0.0
        %1786 = vmatpush1.msra.mxu0 0.0
        %1787 = vmatprep.subr.mxu0 0.0
        %1788 = vmatpush1.msra.mxu0 0.0
        %1789 = vmatprep.subr.mxu0 0.0
        %1790 = vmatpush1.msra.mxu0 0.0
        %1791 = vmatprep.subr.mxu0 0.0
        %1792 = vmatpush1.msra.mxu0 0.0
        %1793 = vmatprep.subr.mxu0 0.0
        %1794 = vmatpush1.msra.mxu0 0.0
        %1795 = vmatprep.subr.mxu0 0.0
        %1796 = vmatpush1.msra.mxu0 0.0
        %1797 = vmatprep.subr.mxu0 0.0
        %1798 = vmatpush1.msra.mxu0 0.0
        %1799 = vmatprep.mubr.f32.mxu0 0.0
        %1800 = vmatmul.mubr.f32.gmra.mrb[0].mxu0 %v674
        %v1801 = vpop.f32.mrb[0].mxu0
        %v1802 = vadd.f32 0.0, %v1801
        %v1803 = vpop.f32.mrb[0].mxu0
        %1804 = vmatprep.mubr.f32.mxu0 0.0
        %1805 = vmatmul.mubr.f32.gmra.mrb[0].mxu0 %v676
        %v1806 = vpop.f32.mrb[0].mxu0
        %v1807 = vadd.f32 0.0, %v1806
        %v1808 = vpop.f32.mrb[0].mxu0
        %1809 = vmatprep.mubr.f32.mxu0 0.0
        %1810 = vmatmul.mubr.f32.gmra.mrb[0].mxu0 %v678
        %v1811 = vpop.f32.mrb[0].mxu0
        %v1812 = vadd.f32 0.0, %v1811
        %v1813 = vpop.f32.mrb[0].mxu0
        %1814 = vmatprep.mubr.f32.mxu0 0.0
        %1815 = vmatmul.mubr.f32.gmra.mrb[0].mxu0 %v680
        %v1816 = vpop.f32.mrb[0].mxu0
        %v1817 = vadd.f32 0.0, %v1816
        %v1818 = vpop.f32.mrb[0].mxu0
        %1819 = vmatprep.mubr.f32.mxu0 0.0
        %1820 = vmatmul.mubr.f32.gmra.mrb[0].mxu0 %v682
        %v1821 = vpop.f32.mrb[0].mxu0
        %v1822 = vadd.f32 0.0, %v1821
        %v1823 = vpop.f32.mrb[0].mxu0
        %1824 = vmatprep.mubr.f32.mxu0 0.0
        %1825 = vmatmul.mubr.f32.gmra.mrb[0].mxu0 %v684
        %v1826 = vpop.f32.mrb[0].mxu0
        %v1827 = vadd.f32 0.0, %v1826
        %v1828 = vpop.f32.mrb[0].mxu0
        %1829 = vmatprep.mubr.f32.mxu0 0.0
        %1830 = vmatmul.mubr.f32.gmra.mrb[0].mxu0 %v686
        %v1831 = vpop.f32.mrb[0].mxu0
        %v1832 = vadd.f32 0.0, %v1831
        %v1833 = vpop.f32.mrb[0].mxu0
        %1834 = vmatprep.mubr.f32.mxu0 0.0
        %1835 = vmatmul.mubr.f32.gmra.mrb[0].mxu0 %v688
        %v1836 = vpop.f32.mrb[0].mxu0
        %v1837 = vadd.f32 0.0, %v1836
        %v1838 = vpop.f32.mrb[0].mxu0
        %1839 = vmatprep.mubr.f32.mxu0 0.0
        %1840 = vmatmul.mubr.f32.gmra.mrb[0].mxu0 %v690
        %v1841 = vpop.f32.mrb[0].mxu0
        %v1842 = vadd.f32 0.0, %v1841
        %v1843 = vpop.f32.mrb[0].mxu0
        %1844 = vmatprep.mubr.f32.mxu0 0.0
        %1845 = vmatmul.mubr.f32.gmra.mrb[0].mxu0 %v692
        %v1846 = vpop.f32.mrb[0].mxu0
        %v1847 = vadd.f32 0.0, %v1846
        %v1848 = vpop.f32.mrb[0].mxu0
        %1849 = vmatprep.mubr.f32.mxu0 0.0
        %1850 = vmatmul.mubr.f32.gmra.mrb[0].mxu0 %v694
        %v1851 = vpop.f32.mrb[0].mxu0
        %v1852 = vadd.f32 0.0, %v1851
        %v1853 = vpop.f32.mrb[0].mxu0
        %1854 = vmatprep.mubr.f32.mxu0 0.0
        %1855 = vmatmul.mubr.f32.gmra.mrb[0].mxu0 %v696
        %v1856 = vpop.f32.mrb[0].mxu0
        %v1857 = vadd.f32 0.0, %v1856
        %v1858 = vpop.f32.mrb[0].mxu0
        %1859 = vmatprep.mubr.f32.mxu0 0.0
        %1860 = vmatmul.mubr.f32.gmra.mrb[0].mxu0 %v1211
        %v1861 = vpop.f32.mrb[0].mxu0
        %v1862 = vadd.f32 0.0, %v1861
        %v1863 = vpop.f32.mrb[0].mxu0
        %1864 = vmatprep.mubr.f32.mxu0 0.0
        %1865 = vmatmul.mubr.f32.gmra.mrb[0].mxu0 %v1213
        %v1866 = vpop.f32.mrb[0].mxu0
        %v1867 = vadd.f32 0.0, %v1866
        %v1868 = vpop.f32.mrb[0].mxu0
        %1869 = vmatprep.mubr.f32.mxu0 0.0
        %1870 = vmatmul.mubr.f32.gmra.mrb[0].mxu0 %v1728
        %v1871 = vpop.f32.mrb[0].mxu0
        %v1872 = vadd.f32 0.0, %v1871
        %v1873 = vpop.f32.mrb[0].mxu0
        %1874 = vmatprep.mubr.f32.mxu0 0.0
        %1875 = vmatmul.mubr.f32.gmra.mrb[0].mxu0 %v1730
        %v1876 = vpop.f32.mrb[0].mxu0
        %v1877 = vadd.f32 0.0, %v1876
        %v1878 = vpop.f32.mrb[0].mxu0
        %1879 = vdwg.mxu0
        %v1880 = vadd.f32 %v1707, %v1802
        %v1881 = vadd.f32 %v1708, %v1807
        %v1882 = vadd.f32 %v1709, %v1812
        %v1883 = vadd.f32 %v1710, %v1817
        %v1884 = vadd.f32 %v1711, %v1822
        %v1885 = vadd.f32 %v1712, %v1827
        %v1886 = vadd.f32 %v1713, %v1832
        %v1887 = vadd.f32 %v1714, %v1837
        %v1888 = vadd.f32 %v1715, %v1842
        %v1889 = vadd.f32 %v1716, %v1847
        %v1890 = vadd.f32 %v1717, %v1852
        %v1891 = vadd.f32 %v1718, %v1857
        %v1892 = vadd.f32 %v1719, %v1862
        %v1893 = vadd.f32 %v1720, %v1867
        %v1894 = vadd.f32 %v1721, %v1872
        %v1895 = vadd.f32 %v1722, %v1877
        %v1896 = vadd.f32 %v1880, %v1881
        %v1897 = vadd.f32 %v1896, %v1882
        %v1898 = vadd.f32 %v1897, %v1883
        %v1899 = vadd.f32 %v1898, %v1884
        %v1900 = vadd.f32 %v1899, %v1885
        %v1901 = vadd.f32 %v1900, %v1886
        %v1902 = vadd.f32 %v1901, %v1887
        %v1903 = vadd.f32 %v1902, %v1888
        %v1904 = vadd.f32 %v1903, %v1889
        %v1905 = vadd.f32 %v1904, %v1890
        %v1906 = vadd.f32 %v1905, %v1891
        %v1907 = vadd.f32 %v1906, %v1892
        %v1908 = vadd.f32 %v1907, %v1893
        %v1909 = vadd.f32 %v1908, %v1894
        %v1910 = vadd.f32 %v1909, %v1895
        %v1911 = vrot.slane %v1910, 4
        %v1912 = vadd.f32 %v1910, %v1911
        %v1913 = vrot.slane %v1912, 2
        %v1914 = vadd.f32 %v1912, %v1913
        %v1915 = vrot.slane %v1914, 1
        %v1916 = vadd.f32 %v1914, %v1915
        %v1917 = vmul.f32 %v1880, %v1880
        %v1918 = vmul.f32 %v1881, %v1881
        %v1919 = vmul.f32 %v1882, %v1882
        %v1920 = vmul.f32 %v1883, %v1883
        %v1921 = vmul.f32 %v1884, %v1884
        %v1922 = vmul.f32 %v1885, %v1885
        %v1923 = vmul.f32 %v1886, %v1886
        %v1924 = vmul.f32 %v1887, %v1887
        %v1925 = vmul.f32 %v1888, %v1888
        %v1926 = vmul.f32 %v1889, %v1889
        %v1927 = vmul.f32 %v1890, %v1890
        %v1928 = vmul.f32 %v1891, %v1891
        %v1929 = vmul.f32 %v1892, %v1892
        %v1930 = vmul.f32 %v1893, %v1893
        %v1931 = vmul.f32 %v1894, %v1894
        %v1932 = vmul.f32 %v1895, %v1895
        %v1933 = vadd.f32 %v1917, %v1918
        %v1934 = vadd.f32 %v1933, %v1919
        %v1935 = vadd.f32 %v1934, %v1920
        %v1936 = vadd.f32 %v1935, %v1921
        %v1937 = vadd.f32 %v1936, %v1922
        %v1938 = vadd.f32 %v1937, %v1923
        %v1939 = vadd.f32 %v1938, %v1924
        %v1940 = vadd.f32 %v1939, %v1925
        %v1941 = vadd.f32 %v1940, %v1926
        %v1942 = vadd.f32 %v1941, %v1927
        %v1943 = vadd.f32 %v1942, %v1928
        %v1944 = vadd.f32 %v1943, %v1929
        %v1945 = vadd.f32 %v1944, %v1930
        %v1946 = vadd.f32 %v1945, %v1931
        %v1947 = vadd.f32 %v1946, %v1932
        %v1948 = vrot.slane %v1947, 4
        %v1949 = vadd.f32 %v1947, %v1948
        %v1950 = vrot.slane %v1949, 2
        %v1951 = vadd.f32 %v1949, %v1950
        %v1952 = vrot.slane %v1951, 1
        %v1953 = vadd.f32 %v1951, %v1952
        %vm1954 = vcmask 1040384
        %v1955 = vsel %vm1954, %v1916, %v1953
        %1956 = vst [vmem:[%s150] sm:$0x3] %v1955
        %s1957 = sand.u32 %s85, 1
        %s1958 = scalar_lea.sflag [#allocation3], %s1957
        %s1959 = sand.u32 %s85, 1
        %s1960 = smul.addr %s1959, 2
        %s1961 = scalar_lea.vmem [#allocation2], %s1960
        // Predicated region
        $region29: #{tpu_custom_call.1} parent=27 // pred_check
          %p1962 = pneg %p95
        $region30: #{tpu_custom_call.1} parent=27 // pred_check_branch
          %1964 = sbr.rel (%p1962) target = $region32
        $region31: #{tpu_custom_call.1} parent=27 // pred_region
          %s1966 = ssub.s32 32, 32
          %1967 = vsyncadd %s1958, %s1966
          %s1968 = smul.addr %s20, 2
          %s1969 = sadd.s32 %s21, %s1968
          %s1970 = smul.addr %s1969, 32
          %s1971 = scalar_lea.hbm %s2, %s1970
          %s1973 = sshll.u32 %s1961, 4
          %s1974 = int_to_ptr.vmem [resolvable:$true] %s1973
          %1976 = dma.vmem_to_hbm [thread:$0]  %s1974, 32, %s1971, %s1958
        $region32: #{tpu_custom_call.1} parent=27 // pred_fallthru
          _
      $region28: #{tpu_custom_call.1} parent=5 // pred_fallthru
        _
      %p1977 = scmp.le.s32.totalorder 2, %s11
      // Predicated region
      $region33: #{tpu_custom_call.1} parent=5 // pred_check
        %p1978 = pneg %p1977
      $region34: #{tpu_custom_call.1} parent=5 // pred_check_branch
        %1980 = sbr.rel (%p1978) target = $region36
      $region35: #{tpu_custom_call.1} parent=5 // pred_region
        %s1981 = ssub.s32 %s11, 2
        // Predicated region
        $region37: #{tpu_custom_call.1} parent=35 // pred_check
          %p1982 = pneg %p101
        $region38: #{tpu_custom_call.1} parent=35 // pred_check_branch
          %1984 = sbr.rel (%p1982) target = $region40
        $region39: #{tpu_custom_call.1} parent=35 // pred_region
          %s1985 = sand.u32 %s86, 1
          %s1986 = scalar_lea.sflag [#allocation3], %s1985
          %s1987 = sand.u32 %s86, 1
          %s1988 = smul.addr %s1987, 2
          %s1989 = scalar_lea.vmem [#allocation2], %s1988
          %1990 = dma.done %s1986, 32
        $region40: #{tpu_custom_call.1} parent=35 // pred_fallthru
          _
      $region36: #{tpu_custom_call.1} parent=5 // pred_fallthru
        _
    $region6: #{tpu_custom_call.1} parent=1 // loop_footer
      %s15 = sadd.s32 1, %s11
    $region7: #{tpu_custom_call.1} parent=1 // loop_footer_branch
      %10 = sbr.rel target = $region3
    $region8: #{tpu_custom_call.1} parent=1 // loop_exit
      _
    %1991 = vsyncpa [#allocation3], 1
    %s1992 = scalar_lea.sflag [#allocation3], 1
    %1993 = vsyncpa %s1992, 1

</llo_original>
